<compile_context>
chip_gen: v6e
topology: v6e:2x2x1
jax: 0.10.0
libtpu: 0.0.40
codegen_flags: <defaults>
</compile_context>

<pallas_src>
import jax
import jax.numpy as jnp
from jax import lax
from jax.experimental import pallas as pl
from jax.experimental.pallas import tpu as pltpu

MID = 64   # hidden channels fixed by the module (conv1/conv2 output 64 ch)
CP = 128   # output channels zero-padded to one full lane width


def basic_block1_kernel(x_ref, w14_ref, b14_ref, w2_ref, b2_ref,
                        w3_ref, b3_ref, o_ref, pad_ref):
    HW, _ = x_ref.shape
    H = pad_ref.shape[0] - 2
    W = pad_ref.shape[1] - 2

    x = x_ref[...]                                        # (HW, Cin)

    # ---- conv4 (identity) and conv1 fused: one K=Cin matmul ----
    # columns [0:CP)      -> conv4 + bn4 + relu (zero-padded past Cout)
    # columns [CP:CP+MID) -> conv1 + bn1 + relu
    h14 = jnp.dot(x, w14_ref[...], preferred_element_type=jnp.float32)
    h14 = jnp.maximum(h14 + b14_ref[...], 0.0)
    ident = h14[:, :CP]                                   # (HW, 128)
    h1 = h14[:, CP:]                                      # (HW, 64)

    # ---- conv2 (3x3, pad=1) + bn2 + relu as ONE im2col matmul ----
    # Zero-padded activation lives in a VMEM scratch (re-zeroed every step so
    # it is correct regardless of which core handles which batch element).
    pad_ref[...] = jnp.zeros(pad_ref.shape, jnp.float32)
    pad_ref[1:H + 1, 1:W + 1, :] = h1.reshape(H, W, MID)
    taps = [pad_ref[ky:ky + H, kx:kx + W, :].reshape(HW, MID)
            for ky in range(3) for kx in range(3)]
    col = jnp.concatenate(taps, axis=1)                   # (HW, 9*MID)
    h2 = jnp.dot(col, w2_ref[...], preferred_element_type=jnp.float32)
    h2 = jnp.maximum(h2 + b2_ref[...], 0.0)               # (HW, 64)

    # ---- conv3 (1x1) + bn3, residual add, relu ----
    h3 = jnp.dot(h2, w3_ref[...], preferred_element_type=jnp.float32)
    o_ref[...] = jnp.maximum(h3 + b3_ref[...] + ident, 0.0)   # (HW, 128)


def basic_block1(x, p, cout):
    """x: (N, H, W, Cin) float32 NHWC. p: packed/folded params. cout: real Cout."""
    N, H, W, Cin = x.shape
    HW = H * W
    x2 = x.reshape(N, HW, Cin)            # wrapper-side flatten (free, row-major)

    full = lambda shp: pl.BlockSpec(shp, lambda n: (0,) * len(shp))

    out = pl.pallas_call(
        basic_block1_kernel,
        out_shape=jax.ShapeDtypeStruct((N, HW, CP), jnp.float32),
        grid_spec=pltpu.PrefetchScalarGridSpec(
            num_scalar_prefetch=0,
            grid=(N,),
            in_specs=[
                pl.BlockSpec((None, HW, Cin), lambda n: (n, 0, 0)),  # x
                full((Cin, CP + MID)),        # w14 = [conv4*s4 | conv1*s1]
                full((1, CP + MID)),          # b14
                full((9 * MID, MID)),         # w2 unfolded (im2col order), *s2
                full((1, MID)),               # b2
                full((MID, CP)),              # w3 * s3, Cout padded to 128
                full((1, CP)),                # b3
            ],
            out_specs=pl.BlockSpec((None, HW, CP), lambda n: (n, 0, 0)),
            scratch_shapes=[pltpu.VMEM((H + 2, W + 2, MID), jnp.float32)],
        ),
        compiler_params=pltpu.CompilerParams(
            dimension_semantics=("parallel",)),
    )(x2, p["w14"], p["b14"], p["w2u"], p["b2"], p["w3p"], p["b3p"])

    # un-pad the lane-dense output and restore NHWC (free, row-major)
    return out[:, :, :cout].reshape(N, H, W, cout)


# ----------------------- parameter construction -----------------------------

def make_raw_params(key, inplanes, outplanes):
    ks = jax.random.split(key, 24)
    f = jnp.float32

    def rnd(k, shape, scale=0.1):
        return (scale * jax.random.normal(k, shape)).astype(f)

    # conv weights stored channel-last (…, Cin, Cout) / HWIO for the 3x3
    w1 = rnd(ks[0], (inplanes, MID))
    w2 = rnd(ks[1], (3, 3, MID, MID))
    w3 = rnd(ks[2], (MID, outplanes))
    w4 = rnd(ks[3], (inplanes, outplanes))
    b1 = rnd(ks[4], (MID,))
    b2 = rnd(ks[5], (MID,))
    b3 = rnd(ks[6], (outplanes,))
    b4 = rnd(ks[7], (outplanes,))

    def bn(k0, k1, k2, k3, c):
        gamma = 1.0 + rnd(k0, (c,))
        beta = rnd(k1, (c,))
        mean = rnd(k2, (c,))
        var = 1.0 + 0.1 * jax.random.uniform(k3, (c,)).astype(f)
        return (gamma, beta, mean, var)

    return dict(
        w1=w1, b1=b1, bn1=bn(ks[8], ks[9], ks[10], ks[11], MID),
        w2=w2, b2=b2, bn2=bn(ks[12], ks[13], ks[14], ks[15], MID),
        w3=w3, b3=b3, bn3=bn(ks[16], ks[17], ks[18], ks[19], outplanes),
        w4=w4, b4=b4, bn4=bn(ks[20], ks[21], ks[22], ks[23], outplanes),
    )


def _fold(w, b, bn_stats, eps=1e-5):
    """Fold eval-mode BN (scale into weight columns, rest into bias)."""
    gamma, beta, mean, var = bn_stats
    s = gamma / jnp.sqrt(var + eps)
    return w * s, beta + (b - mean) * s


def pack_params(raw, inplanes, outplanes):
    w1f, b1f = _fold(raw["w1"], raw["b1"], raw["bn1"])
    w2f, b2f = _fold(raw["w2"], raw["b2"], raw["bn2"])
    w3f, b3f = _fold(raw["w3"], raw["b3"], raw["bn3"])
    w4f, b4f = _fold(raw["w4"], raw["b4"], raw["bn4"])

    # merged conv4|conv1 weight: columns [0:CP) identity branch (padded),
    # columns [CP:CP+MID) main branch
    w14 = jnp.zeros((inplanes, CP + MID), jnp.float32)
    w14 = w14.at[:, :outplanes].set(w4f).at[:, CP:].set(w1f)
    b14 = jnp.zeros((1, CP + MID), jnp.float32)
    b14 = b14.at[0, :outplanes].set(b4f).at[0, CP:].set(b1f)

    # 3x3 conv unfolded for im2col: row index = (ky*3 + kx)*MID + ci
    w2u = w2f.reshape(9 * MID, MID)
    b2 = b2f.reshape(1, MID)

    # conv3, Cout padded to 128 lanes
    w3p = jnp.zeros((MID, CP), jnp.float32).at[:, :outplanes].set(w3f)
    b3p = jnp.zeros((1, CP), jnp.float32).at[0, :outplanes].set(b3f)

    return dict(w14=w14, b14=b14, w2u=w2u, b2=b2, w3p=w3p, b3p=b3p)


# ----------------------- pure-JAX reference (for validation) ----------------

def reference(x, r, eps=1e-5):
    hp = lax.Precision.HIGHEST

    def conv1x1(x, w, b):
        y = lax.conv_general_dilated(
            x, w.reshape(1, 1, *w.shape), (1, 1), [(0, 0), (0, 0)],
            dimension_numbers=("NHWC", "HWIO", "NHWC"), precision=hp)
        return y + b

    def conv3x3(x, w, b):
        y = lax.conv_general_dilated(
            x, w, (1, 1), [(1, 1), (1, 1)],
            dimension_numbers=("NHWC", "HWIO", "NHWC"), precision=hp)
        return y + b

    def bn(y, stats):
        gamma, beta, mean, var = stats
        return (y - mean) * (gamma / jnp.sqrt(var + eps)) + beta

    relu = lambda t: jnp.maximum(t, 0.0)
    ident = relu(bn(conv1x1(x, r["w4"], r["b4"]), r["bn4"]))
    out = relu(bn(conv1x1(x, r["w1"], r["b1"]), r["bn1"]))
    out = relu(bn(conv3x3(out, r["w2"], r["b2"]), r["bn2"]))
    out = bn(conv1x1(out, r["w3"], r["b3"]), r["bn3"])
    return relu(out + ident)


if __name__ == "__main__":
    N, Cin, H, W = 2, 4, 16, 16
    Cout = 8   # W * Cout = 128 => lane-dense output after padding

    key = jax.random.PRNGKey(0)
    kx, kp = jax.random.split(key)
    # PyTorch input would be NCHW [2, 4, 16, 16]; kernel uses NHWC.
    x_nchw = jax.random.normal(kx, (N, Cin, H, W), dtype=jnp.float32)
    x = jnp.transpose(x_nchw, (0, 2, 3, 1))  # -> NHWC

    raw = make_raw_params(kp, Cin, Cout)
    packed = pack_params(raw, Cin, Cout)

    out = jax.block_until_ready(basic_block1(x, packed, Cout))
    ref = jax.block_until_ready(reference(x, raw))

    assert out.shape == (N, H, W, Cout)
    err = float(jnp.max(jnp.abs(out - ref)))
    assert jnp.allclose(out, ref, rtol=1e-4, atol=1e-4), f"max abs err {err}"

    print("KERNEL_OK")
</pallas_src>

<mosaic_0001>
module attributes {stable_mosaic.version = 11 : i64} {
  func.func @basic_block1_kernel(%arg0: i32, %arg1: memref<1x256x4xf32, #tpu.memory_space<vmem>>, %arg2: memref<4x192xf32, #tpu.memory_space<vmem>>, %arg3: memref<1x192xf32, #tpu.memory_space<vmem>>, %arg4: memref<576x64xf32, #tpu.memory_space<vmem>>, %arg5: memref<1x64xf32, #tpu.memory_space<vmem>>, %arg6: memref<64x128xf32, #tpu.memory_space<vmem>>, %arg7: memref<1x128xf32, #tpu.memory_space<vmem>>, %arg8: memref<1x256x128xf32, #tpu.memory_space<vmem>>, %arg9: memref<18x18x64xf32, #tpu.memory_space<vmem>>) attributes {dimension_semantics = [#tpu.dimension_semantics<parallel>], iteration_bounds = array<i64: 2>, scalar_prefetch = 0 : i64, scratch_operands = 1 : i64, tpu.core_type = #tpu.core_type<tc>, window_params = [{transform_indices = @transform_0, window_bounds = array<i64: 1, 256, 4>}, {pipeline_mode = #tpu.pipeline_mode<synchronous>, transform_indices = @transform_1, window_bounds = array<i64: 4, 192>}, {pipeline_mode = #tpu.pipeline_mode<synchronous>, transform_indices = @transform_2, window_bounds = array<i64: 1, 192>}, {pipeline_mode = #tpu.pipeline_mode<synchronous>, transform_indices = @transform_3, window_bounds = array<i64: 576, 64>}, {pipeline_mode = #tpu.pipeline_mode<synchronous>, transform_indices = @transform_4, window_bounds = array<i64: 1, 64>}, {pipeline_mode = #tpu.pipeline_mode<synchronous>, transform_indices = @transform_5, window_bounds = array<i64: 64, 128>}, {pipeline_mode = #tpu.pipeline_mode<synchronous>, transform_indices = @transform_6, window_bounds = array<i64: 1, 128>}, {transform_indices = @transform_7, window_bounds = array<i64: 1, 256, 128>}]} {
    %c0 = arith.constant 0 : index
    %c0_0 = arith.constant 0 : index
    %c0_1 = arith.constant 0 : index
    %0 = vector.load %arg1[%c0, %c0_0, %c0_1] : memref<1x256x4xf32, #tpu.memory_space<vmem>>, vector<1x256x4xf32>
    %1 = vector.shape_cast %0 : vector<1x256x4xf32> to vector<256x4xf32>
    %c0_2 = arith.constant 0 : index
    %c0_3 = arith.constant 0 : index
    %2 = vector.load %arg2[%c0_2, %c0_3] : memref<4x192xf32, #tpu.memory_space<vmem>>, vector<4x192xf32>
    %cst = arith.constant dense<0.000000e+00> : vector<256x192xf32>
    %3 = tpu.matmul %1, %2, %cst {dimension_numbers = #tpu.dot_dimension_numbers<[1], [0], [0], [1], [0, 0, 1, 1], [], []>} : vector<256x4xf32>, vector<4x192xf32>, vector<256x192xf32> -> vector<256x192xf32>
    %c0_4 = arith.constant 0 : index
    %c0_5 = arith.constant 0 : index
    %4 = vector.load %arg3[%c0_4, %c0_5] : memref<1x192xf32, #tpu.memory_space<vmem>>, vector<1x192xf32>
    %5 = vector.broadcast %4 : vector<1x192xf32> to vector<256x192xf32>
    %6 = arith.addf %3, %5 : vector<256x192xf32>
    %cst_6 = arith.constant 0.000000e+00 : f32
    %7 = vector.broadcast %cst_6 : f32 to vector<256x192xf32>
    %8 = arith.maximumf %6, %7 : vector<256x192xf32>
    %9 = vector.extract_strided_slice %8 {offsets = [0, 0], sizes = [256, 128], strides = [1, 1]} : vector<256x192xf32> to vector<256x128xf32>
    %10 = vector.extract_strided_slice %8 {offsets = [0, 128], sizes = [256, 64], strides = [1, 1]} : vector<256x192xf32> to vector<256x64xf32>
    %cst_7 = arith.constant 0.000000e+00 : f32
    %11 = vector.broadcast %cst_7 : f32 to vector<18x18x64xf32>
    %c0_8 = arith.constant 0 : index
    %c0_9 = arith.constant 0 : index
    %c0_10 = arith.constant 0 : index
    %12 = vector.load %arg9[%c0_8, %c0_9, %c0_10] : memref<18x18x64xf32, #tpu.memory_space<vmem>>, vector<18x18x64xf32>
    tpu.vector_store %arg9[%c0_8, %c0_9, %c0_10], %11 {strides = array<i32>} : memref<18x18x64xf32, #tpu.memory_space<vmem>>, vector<18x18x64xf32>,
    %13 = vector.shape_cast %10 : vector<256x64xf32> to vector<16x16x64xf32>
    %c1 = arith.constant 1 : index
    %c1_11 = arith.constant 1 : index
    %c0_12 = arith.constant 0 : index
    %14 = vector.load %arg9[%c1, %c1_11, %c0_12] : memref<18x18x64xf32, #tpu.memory_space<vmem>>, vector<16x16x64xf32>
    tpu.vector_store %arg9[%c1, %c1_11, %c0_12], %13 {strides = array<i32>} : memref<18x18x64xf32, #tpu.memory_space<vmem>>, vector<16x16x64xf32>,
    %c0_13 = arith.constant 0 : index
    %c0_14 = arith.constant 0 : index
    %c0_15 = arith.constant 0 : index
    %15 = vector.load %arg9[%c0_13, %c0_14, %c0_15] : memref<18x18x64xf32, #tpu.memory_space<vmem>>, vector<16x16x64xf32>
    %16 = vector.shape_cast %15 : vector<16x16x64xf32> to vector<256x64xf32>
    %c0_16 = arith.constant 0 : index
    %c1_17 = arith.constant 1 : index
    %c0_18 = arith.constant 0 : index
    %17 = vector.load %arg9[%c0_16, %c1_17, %c0_18] : memref<18x18x64xf32, #tpu.memory_space<vmem>>, vector<16x16x64xf32>
    %18 = vector.shape_cast %17 : vector<16x16x64xf32> to vector<256x64xf32>
    %c0_19 = arith.constant 0 : index
    %c2 = arith.constant 2 : index
    %c0_20 = arith.constant 0 : index
    %19 = vector.load %arg9[%c0_19, %c2, %c0_20] : memref<18x18x64xf32, #tpu.memory_space<vmem>>, vector<16x16x64xf32>
    %20 = vector.shape_cast %19 : vector<16x16x64xf32> to vector<256x64xf32>
    %c1_21 = arith.constant 1 : index
    %c0_22 = arith.constant 0 : index
    %c0_23 = arith.constant 0 : index
    %21 = vector.load %arg9[%c1_21, %c0_22, %c0_23] : memref<18x18x64xf32, #tpu.memory_space<vmem>>, vector<16x16x64xf32>
    %22 = vector.shape_cast %21 : vector<16x16x64xf32> to vector<256x64xf32>
    %c1_24 = arith.constant 1 : index
    %c1_25 = arith.constant 1 : index
    %c0_26 = arith.constant 0 : index
    %23 = vector.load %arg9[%c1_24, %c1_25, %c0_26] : memref<18x18x64xf32, #tpu.memory_space<vmem>>, vector<16x16x64xf32>
    %24 = vector.shape_cast %23 : vector<16x16x64xf32> to vector<256x64xf32>
    %c1_27 = arith.constant 1 : index
    %c2_28 = arith.constant 2 : index
    %c0_29 = arith.constant 0 : index
    %25 = vector.load %arg9[%c1_27, %c2_28, %c0_29] : memref<18x18x64xf32, #tpu.memory_space<vmem>>, vector<16x16x64xf32>
    %26 = vector.shape_cast %25 : vector<16x16x64xf32> to vector<256x64xf32>
    %c2_30 = arith.constant 2 : index
    %c0_31 = arith.constant 0 : index
    %c0_32 = arith.constant 0 : index
    %27 = vector.load %arg9[%c2_30, %c0_31, %c0_32] : memref<18x18x64xf32, #tpu.memory_space<vmem>>, vector<16x16x64xf32>
    %28 = vector.shape_cast %27 : vector<16x16x64xf32> to vector<256x64xf32>
    %c2_33 = arith.constant 2 : index
    %c1_34 = arith.constant 1 : index
    %c0_35 = arith.constant 0 : index
    %29 = vector.load %arg9[%c2_33, %c1_34, %c0_35] : memref<18x18x64xf32, #tpu.memory_space<vmem>>, vector<16x16x64xf32>
    %30 = vector.shape_cast %29 : vector<16x16x64xf32> to vector<256x64xf32>
    %c2_36 = arith.constant 2 : index
    %c2_37 = arith.constant 2 : index
    %c0_38 = arith.constant 0 : index
    %31 = vector.load %arg9[%c2_36, %c2_37, %c0_38] : memref<18x18x64xf32, #tpu.memory_space<vmem>>, vector<16x16x64xf32>
    %32 = vector.shape_cast %31 : vector<16x16x64xf32> to vector<256x64xf32>
    %33 = tpu.concatenate %16, %18, %20, %22, %24, %26, %28, %30, %32 in 1 : vector<256x64xf32>, vector<256x64xf32>, vector<256x64xf32>, vector<256x64xf32>, vector<256x64xf32>, vector<256x64xf32>, vector<256x64xf32>, vector<256x64xf32>, vector<256x64xf32> -> vector<256x576xf32>
    %c0_39 = arith.constant 0 : index
    %c0_40 = arith.constant 0 : index
    %34 = vector.load %arg4[%c0_39, %c0_40] : memref<576x64xf32, #tpu.memory_space<vmem>>, vector<576x64xf32>
    %cst_41 = arith.constant dense<0.000000e+00> : vector<256x64xf32>
    %35 = tpu.matmul %33, %34, %cst_41 {dimension_numbers = #tpu.dot_dimension_numbers<[1], [0], [0], [1], [0, 0, 1, 1], [], []>} : vector<256x576xf32>, vector<576x64xf32>, vector<256x64xf32> -> vector<256x64xf32>
    %c0_42 = arith.constant 0 : index
    %c0_43 = arith.constant 0 : index
    %36 = vector.load %arg5[%c0_42, %c0_43] : memref<1x64xf32, #tpu.memory_space<vmem>>, vector<1x64xf32>
    %37 = vector.broadcast %36 : vector<1x64xf32> to vector<256x64xf32>
    %38 = arith.addf %35, %37 : vector<256x64xf32>
    %cst_44 = arith.constant 0.000000e+00 : f32
    %39 = vector.broadcast %cst_44 : f32 to vector<256x64xf32>
    %40 = arith.maximumf %38, %39 : vector<256x64xf32>
    %c0_45 = arith.constant 0 : index
    %c0_46 = arith.constant 0 : index
    %41 = vector.load %arg6[%c0_45, %c0_46] : memref<64x128xf32, #tpu.memory_space<vmem>>, vector<64x128xf32>
    %cst_47 = arith.constant dense<0.000000e+00> : vector<256x128xf32>
    %42 = tpu.matmul %40, %41, %cst_47 {dimension_numbers = #tpu.dot_dimension_numbers<[1], [0], [0], [1], [0, 0, 1, 1], [], []>} : vector<256x64xf32>, vector<64x128xf32>, vector<256x128xf32> -> vector<256x128xf32>
    %c0_48 = arith.constant 0 : index
    %c0_49 = arith.constant 0 : index
    %43 = vector.load %arg7[%c0_48, %c0_49] : memref<1x128xf32, #tpu.memory_space<vmem>>, vector<1x128xf32>
    %44 = vector.broadcast %43 : vector<1x128xf32> to vector<256x128xf32>
    %45 = arith.addf %42, %44 : vector<256x128xf32>
    %46 = arith.addf %45, %9 : vector<256x128xf32>
    %cst_50 = arith.constant 0.000000e+00 : f32
    %47 = vector.broadcast %cst_50 : f32 to vector<256x128xf32>
    %48 = arith.maximumf %46, %47 : vector<256x128xf32>
    %c0_51 = arith.constant 0 : index
    %c0_52 = arith.constant 0 : index
    %c0_53 = arith.constant 0 : index
    %49 = vector.load %arg8[%c0_51, %c0_52, %c0_53] : memref<1x256x128xf32, #tpu.memory_space<vmem>>, vector<1x256x128xf32>
    %50 = vector.shape_cast %49 : vector<1x256x128xf32> to vector<256x128xf32>
    %51 = vector.shape_cast %48 : vector<256x128xf32> to vector<1x256x128xf32>
    tpu.vector_store %arg8[%c0_51, %c0_52, %c0_53], %51 {strides = array<i32>} : memref<1x256x128xf32, #tpu.memory_space<vmem>>, vector<1x256x128xf32>,
    return
  }
  func.func @transform_0(%arg0: i32) -> (i32, i32, i32) {
    %c0_i32 = arith.constant 0 : i32
    %c0_i32_0 = arith.constant 0 : i32
    %c0_i32_1 = arith.constant 0 : i32
    return %arg0, %c0_i32, %c0_i32_0 : i32, i32, i32
  }
  func.func @transform_1(%arg0: i32) -> (i32, i32) {
    %c0_i32 = arith.constant 0 : i32
    %c0_i32_0 = arith.constant 0 : i32
    %c0_i32_1 = arith.constant 0 : i32
    return %c0_i32, %c0_i32_0 : i32, i32
  }
  func.func @transform_2(%arg0: i32) -> (i32, i32) {
    %c0_i32 = arith.constant 0 : i32
    %c0_i32_0 = arith.constant 0 : i32
    %c0_i32_1 = arith.constant 0 : i32
    return %c0_i32, %c0_i32_0 : i32, i32
  }
  func.func @transform_3(%arg0: i32) -> (i32, i32) {
    %c0_i32 = arith.constant 0 : i32
    %c0_i32_0 = arith.constant 0 : i32
    %c0_i32_1 = arith.constant 0 : i32
    return %c0_i32, %c0_i32_0 : i32, i32
  }
  func.func @transform_4(%arg0: i32) -> (i32, i32) {
    %c0_i32 = arith.constant 0 : i32
    %c0_i32_0 = arith.constant 0 : i32
    %c0_i32_1 = arith.constant 0 : i32
    return %c0_i32, %c0_i32_0 : i32, i32
  }
  func.func @transform_5(%arg0: i32) -> (i32, i32) {
    %c0_i32 = arith.constant 0 : i32
    %c0_i32_0 = arith.constant 0 : i32
    %c0_i32_1 = arith.constant 0 : i32
    return %c0_i32, %c0_i32_0 : i32, i32
  }
  func.func @transform_6(%arg0: i32) -> (i32, i32) {
    %c0_i32 = arith.constant 0 : i32
    %c0_i32_0 = arith.constant 0 : i32
    %c0_i32_1 = arith.constant 0 : i32
    return %c0_i32, %c0_i32_0 : i32, i32
  }
  func.func @transform_7(%arg0: i32) -> (i32, i32, i32) {
    %c0_i32 = arith.constant 0 : i32
    %c0_i32_0 = arith.constant 0 : i32
    %c0_i32_1 = arith.constant 0 : i32
    return %arg0, %c0_i32, %c0_i32_0 : i32, i32, i32
  }
}

</mosaic_0001>

<llo_original>
// kernel: tpu_custom_call.1
$region0: #{tpu_custom_call.1}
  #allocation0 [shape = 'u32[]', space=smem, size = 0x4, offset = 0x4, fixed_abs, tag = 'smem constant byte address 0x4 - core index']
  #allocation1 [shape = 'u32[144,128]{1,0:T(1,128)}', space=vmem, size = 0x12000, scoped, tag = 'internal scratch']
  #allocation2 [shape = 'f32[18,18,64]{2,1,0:T(8,128)}', space=vmem, size = 0x36000, scoped, tag = 'scratch operand']
  %s0 = inlined_call_operand.vmem [shape: f32[2,256,4], index: 0, kind: input, shape index: {}]
  %s1 = inlined_call_operand.vmem [shape: f32[4,192], index: 1, kind: input, shape index: {}]
  %s2 = inlined_call_operand.vmem [shape: f32[1,192], index: 2, kind: input, shape index: {}]
  %s3 = inlined_call_operand.vmem [shape: f32[576,64], index: 3, kind: input, shape index: {}]
  %s4 = inlined_call_operand.vmem [shape: f32[1,64], index: 4, kind: input, shape index: {}]
  %s5 = inlined_call_operand.vmem [shape: f32[64,128], index: 5, kind: input, shape index: {}]
  %s6 = inlined_call_operand.vmem [shape: f32[1,128], index: 6, kind: input, shape index: {}]
  %s7 = inlined_call_operand.hbm [shape: f32[2,256,128], index: 7, kind: output, shape index: {}]
  %s8 = sld [smem:[#allocation0]]
  $region61: #{tpu_custom_call.1} parent=0
    _
  %s10 = ssub.s32 1, %s8
  %s11 = scalar_select 0, %s10, %s8
  $region1: #{tpu_custom_call.1} parent=0
    #allocation3 [shape = 'u8[262144]{0}', space=vmem, size = 0x40000, scoped, tag = 'output window, operand 0']
    #allocation4 [shape = 's32[2]{0}', space=sflag, size = 0x8, scoped, tag = 'scoped memory for tpu_custom_call.1']
    %12 = vsyncpa [#allocation4], 0
    %s13 = scalar_lea.sflag [#allocation4], 1
    %14 = vsyncpa %s13, 0
    loop: start=0, step=1, limit=4
    $region2: #{tpu_custom_call.1} parent=1 // loop_pre_header
      _
    $region3: #{tpu_custom_call.1} parent=1 // loop_header
      %s16 = sphi 0, %s20
      %p17 = scmp.ge.s32.totalorder %s16, 4
      %s26 = sphi 0, %s28
      %s29 = sphi 0, %s26
      %s30 = sphi 0, %s29
      %s46 = sphi 0, %s30
      %s50 = sphi 0, %s50
      %s52 = sphi 0, %s50
      %s53 = sphi 0, %s52
      %s67 = sphi 0, %s53
      %s71 = sphi 0, %s71
      %s73 = sphi 0, %s71
      %s74 = sphi 0, %s73
      %s88 = sphi 0, %s74
      %s92 = sphi 0, %s92
      %s94 = sphi 0, %s92
      %s95 = sphi 0, %s94
      %s109 = sphi 0, %s95
      %s113 = sphi 0, %s113
      %s115 = sphi 0, %s113
      %s116 = sphi 0, %s115
      %s130 = sphi 0, %s116
      %s134 = sphi 0, %s134
      %s136 = sphi 0, %s134
      %s137 = sphi 0, %s136
      %s151 = sphi 0, %s137
      %s155 = sphi 0, %s155
      %s157 = sphi 0, %s155
      %s158 = sphi 0, %s157
      %s172 = sphi 0, %s158
      %s178 = sphi 0, %s180
      %s181 = sphi 0, %s178
      %s182 = sphi 0, %s181
      %s198 = sphi 0, %s182
    $region4: #{tpu_custom_call.1} parent=1 // loop_header_branch
      %19 = sbr.rel (%p17) target = $region8
    $region5: #{tpu_custom_call.1} parent=1 // loop_body
      %s21 = ssub.s32 %s16, 1
      %s22 = ssub.s32 %s16, 2
      %s23 = sadd.s32 %s16, 1
      %s24 = ssub.s32 %s16, %s23
      %p25 = scmp.eq.s32.totalorder %s24, 0
      %s27 = sadd.s32 %s26, 1
      %s28 = scalar_select %p25, %s26, %s27
      %p31 = pneg %p25
      %p32 = scmp.eq.s32.totalorder %s16, 1
      %p33 = por %p31, %p32
      %p34 = scmp.ne.s32.totalorder %s26, %s29
      %p35 = scmp.eq.s32.totalorder %s16, 0
      %p36 = por %p34, %p35
      %p37 = scmp.ne.s32.totalorder %s26, %s29
      %p38 = scmp.eq.s32.totalorder %s21, 1
      %p39 = por %p37, %p38
      %p40 = scmp.ne.s32.totalorder %s29, %s30
      %p41 = scmp.eq.s32.totalorder %s21, 0
      %p42 = por %p40, %p41
      %p43 = scmp.ne.s32.totalorder %s29, %s30
      %p44 = scmp.eq.s32.totalorder %s22, 1
      %p45 = por %p43, %p44
      %p47 = scmp.ne.s32.totalorder %s30, %s46
      %p48 = scmp.eq.s32.totalorder %s22, 0
      %p49 = por %p47, %p48
      %s51 = sadd.s32 %s50, 1
      %p54 = scmp.eq.s32.totalorder %s16, 1
      %p55 = scmp.ne.s32.totalorder %s50, %s52
      %p56 = scmp.eq.s32.totalorder %s16, 0
      %p57 = por %p55, %p56
      %p58 = scmp.ne.s32.totalorder %s50, %s52
      %p59 = scmp.eq.s32.totalorder %s21, 1
      %p60 = por %p58, %p59
      %p61 = scmp.ne.s32.totalorder %s52, %s53
      %p62 = scmp.eq.s32.totalorder %s21, 0
      %p63 = por %p61, %p62
      %p64 = scmp.ne.s32.totalorder %s52, %s53
      %p65 = scmp.eq.s32.totalorder %s22, 1
      %p66 = por %p64, %p65
      %p68 = scmp.ne.s32.totalorder %s53, %s67
      %p69 = scmp.eq.s32.totalorder %s22, 0
      %p70 = por %p68, %p69
      %s72 = sadd.s32 %s71, 1
      %p75 = scmp.eq.s32.totalorder %s16, 1
      %p76 = scmp.ne.s32.totalorder %s71, %s73
      %p77 = scmp.eq.s32.totalorder %s16, 0
      %p78 = por %p76, %p77
      %p79 = scmp.ne.s32.totalorder %s71, %s73
      %p80 = scmp.eq.s32.totalorder %s21, 1
      %p81 = por %p79, %p80
      %p82 = scmp.ne.s32.totalorder %s73, %s74
      %p83 = scmp.eq.s32.totalorder %s21, 0
      %p84 = por %p82, %p83
      %p85 = scmp.ne.s32.totalorder %s73, %s74
      %p86 = scmp.eq.s32.totalorder %s22, 1
      %p87 = por %p85, %p86
      %p89 = scmp.ne.s32.totalorder %s74, %s88
      %p90 = scmp.eq.s32.totalorder %s22, 0
      %p91 = por %p89, %p90
      %s93 = sadd.s32 %s92, 1
      %p96 = scmp.eq.s32.totalorder %s16, 1
      %p97 = scmp.ne.s32.totalorder %s92, %s94
      %p98 = scmp.eq.s32.totalorder %s16, 0
      %p99 = por %p97, %p98
      %p100 = scmp.ne.s32.totalorder %s92, %s94
      %p101 = scmp.eq.s32.totalorder %s21, 1
      %p102 = por %p100, %p101
      %p103 = scmp.ne.s32.totalorder %s94, %s95
      %p104 = scmp.eq.s32.totalorder %s21, 0
      %p105 = por %p103, %p104
      %p106 = scmp.ne.s32.totalorder %s94, %s95
      %p107 = scmp.eq.s32.totalorder %s22, 1
      %p108 = por %p106, %p107
      %p110 = scmp.ne.s32.totalorder %s95, %s109
      %p111 = scmp.eq.s32.totalorder %s22, 0
      %p112 = por %p110, %p111
      %s114 = sadd.s32 %s113, 1
      %p117 = scmp.eq.s32.totalorder %s16, 1
      %p118 = scmp.ne.s32.totalorder %s113, %s115
      %p119 = scmp.eq.s32.totalorder %s16, 0
      %p120 = por %p118, %p119
      %p121 = scmp.ne.s32.totalorder %s113, %s115
      %p122 = scmp.eq.s32.totalorder %s21, 1
      %p123 = por %p121, %p122
      %p124 = scmp.ne.s32.totalorder %s115, %s116
      %p125 = scmp.eq.s32.totalorder %s21, 0
      %p126 = por %p124, %p125
      %p127 = scmp.ne.s32.totalorder %s115, %s116
      %p128 = scmp.eq.s32.totalorder %s22, 1
      %p129 = por %p127, %p128
      %p131 = scmp.ne.s32.totalorder %s116, %s130
      %p132 = scmp.eq.s32.totalorder %s22, 0
      %p133 = por %p131, %p132
      %s135 = sadd.s32 %s134, 1
      %p138 = scmp.eq.s32.totalorder %s16, 1
      %p139 = scmp.ne.s32.totalorder %s134, %s136
      %p140 = scmp.eq.s32.totalorder %s16, 0
      %p141 = por %p139, %p140
      %p142 = scmp.ne.s32.totalorder %s134, %s136
      %p143 = scmp.eq.s32.totalorder %s21, 1
      %p144 = por %p142, %p143
      %p145 = scmp.ne.s32.totalorder %s136, %s137
      %p146 = scmp.eq.s32.totalorder %s21, 0
      %p147 = por %p145, %p146
      %p148 = scmp.ne.s32.totalorder %s136, %s137
      %p149 = scmp.eq.s32.totalorder %s22, 1
      %p150 = por %p148, %p149
      %p152 = scmp.ne.s32.totalorder %s137, %s151
      %p153 = scmp.eq.s32.totalorder %s22, 0
      %p154 = por %p152, %p153
      %s156 = sadd.s32 %s155, 1
      %p159 = scmp.eq.s32.totalorder %s16, 1
      %p160 = scmp.ne.s32.totalorder %s155, %s157
      %p161 = scmp.eq.s32.totalorder %s16, 0
      %p162 = por %p160, %p161
      %p163 = scmp.ne.s32.totalorder %s155, %s157
      %p164 = scmp.eq.s32.totalorder %s21, 1
      %p165 = por %p163, %p164
      %p166 = scmp.ne.s32.totalorder %s157, %s158
      %p167 = scmp.eq.s32.totalorder %s21, 0
      %p168 = por %p166, %p167
      %p169 = scmp.ne.s32.totalorder %s157, %s158
      %p170 = scmp.eq.s32.totalorder %s22, 1
      %p171 = por %p169, %p170
      %p173 = scmp.ne.s32.totalorder %s158, %s172
      %p174 = scmp.eq.s32.totalorder %s22, 0
      %p175 = por %p173, %p174
      %s176 = ssub.s32 %s16, %s23
      %p177 = scmp.eq.s32.totalorder %s176, 0
      %s179 = sadd.s32 %s178, 1
      %s180 = scalar_select %p177, %s178, %s179
      %p183 = pneg %p177
      %p184 = scmp.eq.s32.totalorder %s16, 1
      %p185 = por %p183, %p184
      %p186 = scmp.ne.s32.totalorder %s178, %s181
      %p187 = scmp.eq.s32.totalorder %s16, 0
      %p188 = por %p186, %p187
      %p189 = scmp.ne.s32.totalorder %s178, %s181
      %p190 = scmp.eq.s32.totalorder %s21, 1
      %p191 = por %p189, %p190
      %p192 = scmp.ne.s32.totalorder %s181, %s182
      %p193 = scmp.eq.s32.totalorder %s21, 0
      %p194 = por %p192, %p193
      %p195 = scmp.ne.s32.totalorder %s181, %s182
      %p196 = scmp.eq.s32.totalorder %s22, 1
      %p197 = por %p195, %p196
      %p199 = scmp.ne.s32.totalorder %s182, %s198
      %p200 = scmp.eq.s32.totalorder %s22, 0
      %p201 = por %p199, %p200
      %p202 = scmp.le.s32.totalorder 1, %s16
      %p203 = scmp.lt.s32.totalorder %s16, 3
      %p204 = pnand %p202, %p203
      %p205 = pneg %p204
      // Predicated region
      $region9: #{tpu_custom_call.1} parent=5 // pred_check
        _
      $region10: #{tpu_custom_call.1} parent=5 // pred_check_branch
        %207 = sbr.rel (%p204) target = $region12
      $region11: #{tpu_custom_call.1} parent=5 // pred_region
        %s208 = ssub.s32 %s16, 1
        // Predicated region
        $region13: #{tpu_custom_call.1} parent=11 // pred_check
          %p209 = pneg %p63
        $region14: #{tpu_custom_call.1} parent=11 // pred_check_branch
          %211 = sbr.rel (%p209) target = $region16
        $region15: #{tpu_custom_call.1} parent=11 // pred_region
          _
        $region16: #{tpu_custom_call.1} parent=11 // pred_fallthru
          _
        // Predicated region
        $region17: #{tpu_custom_call.1} parent=11 // pred_check
          %p212 = pneg %p84
        $region18: #{tpu_custom_call.1} parent=11 // pred_check_branch
          %214 = sbr.rel (%p212) target = $region20
        $region19: #{tpu_custom_call.1} parent=11 // pred_region
          _
        $region20: #{tpu_custom_call.1} parent=11 // pred_fallthru
          _
        // Predicated region
        $region21: #{tpu_custom_call.1} parent=11 // pred_check
          %p215 = pneg %p105
        $region22: #{tpu_custom_call.1} parent=11 // pred_check_branch
          %217 = sbr.rel (%p215) target = $region24
        $region23: #{tpu_custom_call.1} parent=11 // pred_region
          _
        $region24: #{tpu_custom_call.1} parent=11 // pred_fallthru
          _
        // Predicated region
        $region25: #{tpu_custom_call.1} parent=11 // pred_check
          %p218 = pneg %p126
        $region26: #{tpu_custom_call.1} parent=11 // pred_check_branch
          %220 = sbr.rel (%p218) target = $region28
        $region27: #{tpu_custom_call.1} parent=11 // pred_region
          _
        $region28: #{tpu_custom_call.1} parent=11 // pred_fallthru
          _
        // Predicated region
        $region29: #{tpu_custom_call.1} parent=11 // pred_check
          %p221 = pneg %p147
        $region30: #{tpu_custom_call.1} parent=11 // pred_check_branch
          %223 = sbr.rel (%p221) target = $region32
        $region31: #{tpu_custom_call.1} parent=11 // pred_region
          _
        $region32: #{tpu_custom_call.1} parent=11 // pred_fallthru
          _
        // Predicated region
        $region33: #{tpu_custom_call.1} parent=11 // pred_check
          %p224 = pneg %p168
        $region34: #{tpu_custom_call.1} parent=11 // pred_check_branch
          %226 = sbr.rel (%p224) target = $region36
        $region35: #{tpu_custom_call.1} parent=11 // pred_region
          _
        $region36: #{tpu_custom_call.1} parent=11 // pred_fallthru
          _
      $region12: #{tpu_custom_call.1} parent=5 // pred_fallthru
        _
      %p227 = scmp.lt.s32.totalorder %s16, 2
      // Predicated region
      $region37: #{tpu_custom_call.1} parent=5 // pred_check
        %p228 = pneg %p227
      $region38: #{tpu_custom_call.1} parent=5 // pred_check_branch
        %230 = sbr.rel (%p228) target = $region40
      $region39: #{tpu_custom_call.1} parent=5 // pred_region
        // Predicated region
        $region41: #{tpu_custom_call.1} parent=39 // pred_check
          %p231 = pneg %p36
        $region42: #{tpu_custom_call.1} parent=39 // pred_check_branch
          %233 = sbr.rel (%p231) target = $region44
        $region43: #{tpu_custom_call.1} parent=39 // pred_region
          %p234 = scmp.lt.s32.totalorder %s16, 1
          %s235 = scalar_select %p234, %s16, 1
          %s236 = smul.addr %s235, 32
          %s237 = smul.addr %s236, 8
          %s238 = scalar_lea.vmem %s0, %s237
        $region44: #{tpu_custom_call.1} parent=39 // pred_fallthru
          _
      $region40: #{tpu_custom_call.1} parent=5 // pred_fallthru
        _
      %p239 = scmp.le.s32.totalorder 1, %s16
      %p240 = scmp.lt.s32.totalorder %s16, 3
      %p241 = pnand %p239, %p240
      %p242 = pneg %p241
      // Predicated region
      $region45: #{tpu_custom_call.1} parent=5 // pred_check
        _
      $region46: #{tpu_custom_call.1} parent=5 // pred_check_branch
        %244 = sbr.rel (%p241) target = $region48
      $region47: #{tpu_custom_call.1} parent=5 // pred_region
        %s245 = ssub.s32 %s16, 1
        %p246 = scmp.lt.s32.totalorder %s21, 1
        %s247 = scalar_select %p246, %s21, 1
        %s248 = smul.addr %s247, 32
        %s249 = smul.addr %s248, 8
        %s250 = scalar_lea.vmem %s0, %s249
        %p251 = pneg %p42
        %p252 = pneg %p39
        %p253 = pneg %p63
        %p254 = pneg %p60
        %p255 = pneg %p84
        %p256 = pneg %p81
        %p257 = pneg %p105
        %p258 = pneg %p102
        %p259 = pneg %p126
        %p260 = pneg %p123
        %p261 = pneg %p147
        %p262 = pneg %p144
        %p263 = pneg %p168
        %p264 = pneg %p165
        %p265 = pneg %p194
        %p266 = pneg %p191
        %s267 = sand.u32 %s181, 1
        %s268 = scalar_lea.sflag [#allocation4], %s267
        %s269 = sand.u32 %s181, 1
        %s270 = smul.addr %s269, 256
        %s271 = scalar_lea.vmem [#allocation3], %s270
        %p272 = scmp.lt.s32.totalorder %s21, 1
        %s273 = scalar_select %p272, %s21, 1
        %s274 = smul.addr %s273, 32
        %s275 = smul.addr %s274, 8
        %s276 = scalar_lea.vmem %s0, %s275
        %v277 = vld [vmem:[%s276] sm:$0xff]
        %v278 = vld [vmem:[%s276 + $0x8] sm:$0xff]
        %v279 = vld [vmem:[%s276 + $0x10] sm:$0xff]
        %v280 = vld [vmem:[%s276 + $0x18] sm:$0xff]
        %v281 = vld [vmem:[%s276 + $0x20] sm:$0xff]
        %v282 = vld [vmem:[%s276 + $0x28] sm:$0xff]
        %v283 = vld [vmem:[%s276 + $0x30] sm:$0xff]
        %v284 = vld [vmem:[%s276 + $0x38] sm:$0xff]
        %v285 = vld [vmem:[%s276 + $0x40] sm:$0xff]
        %v286 = vld [vmem:[%s276 + $0x48] sm:$0xff]
        %v287 = vld [vmem:[%s276 + $0x50] sm:$0xff]
        %v288 = vld [vmem:[%s276 + $0x58] sm:$0xff]
        %v289 = vld [vmem:[%s276 + $0x60] sm:$0xff]
        %v290 = vld [vmem:[%s276 + $0x68] sm:$0xff]
        %v291 = vld [vmem:[%s276 + $0x70] sm:$0xff]
        %v292 = vld [vmem:[%s276 + $0x78] sm:$0xff]
        %v293 = vld [vmem:[%s276 + $0x80] sm:$0xff]
        %v294 = vld [vmem:[%s276 + $0x88] sm:$0xff]
        %v295 = vld [vmem:[%s276 + $0x90] sm:$0xff]
        %v296 = vld [vmem:[%s276 + $0x98] sm:$0xff]
        %v297 = vld [vmem:[%s276 + $0xa0] sm:$0xff]
        %v298 = vld [vmem:[%s276 + $0xa8] sm:$0xff]
        %v299 = vld [vmem:[%s276 + $0xb0] sm:$0xff]
        %v300 = vld [vmem:[%s276 + $0xb8] sm:$0xff]
        %v301 = vld [vmem:[%s276 + $0xc0] sm:$0xff]
        %v302 = vld [vmem:[%s276 + $0xc8] sm:$0xff]
        %v303 = vld [vmem:[%s276 + $0xd0] sm:$0xff]
        %v304 = vld [vmem:[%s276 + $0xd8] sm:$0xff]
        %v305 = vld [vmem:[%s276 + $0xe0] sm:$0xff]
        %v306 = vld [vmem:[%s276 + $0xe8] sm:$0xff]
        %v307 = vld [vmem:[%s276 + $0xf0] sm:$0xff]
        %v308 = vld [vmem:[%s276 + $0xf8] sm:$0xff]
        %v309 = vld [vmem:[%s1] sm:$0xff]
        %v310 = vld [vmem:[%s2] sm:$0x3]
        %v312 = vlaneseq
        %v313 = vshrl.u32 %v312, 7
        %v314 = vsub.s32 0, %v313
        %v315 = vrot.slane %v310, %v314
        %v316 = vlaneseq
        %v317 = vshrl.u32 %v316, 7
        %v318 = vsub.s32 1, %v317
        %v319 = vrot.slane %v310, %v318
        %v323 = vcombine.high %v309, %v309
        %vm324 = vcmask 31744
        %v326 = vsel %vm324, %v277, 0
        %v329 = vsel %vm324, %v278, 0
        %v332 = vsel %vm324, %v279, 0
        %v335 = vsel %vm324, %v280, 0
        %v338 = vsel %vm324, %v281, 0
        %v341 = vsel %vm324, %v282, 0
        %v344 = vsel %vm324, %v283, 0
        %v347 = vsel %vm324, %v284, 0
        %v350 = vsel %vm324, %v285, 0
        %v353 = vsel %vm324, %v286, 0
        %v356 = vsel %vm324, %v287, 0
        %v359 = vsel %vm324, %v288, 0
        %v362 = vsel %vm324, %v289, 0
        %v365 = vsel %vm324, %v290, 0
        %v368 = vsel %vm324, %v291, 0
        %v371 = vsel %vm324, %v292, 0
        %v374 = vsel %vm324, %v293, 0
        %v377 = vsel %vm324, %v294, 0
        %v380 = vsel %vm324, %v295, 0
        %v383 = vsel %vm324, %v296, 0
        %v386 = vsel %vm324, %v297, 0
        %v389 = vsel %vm324, %v298, 0
        %v392 = vsel %vm324, %v299, 0
        %v395 = vsel %vm324, %v300, 0
        %v398 = vsel %vm324, %v301, 0
        %v401 = vsel %vm324, %v302, 0
        %v404 = vsel %vm324, %v303, 0
        %v407 = vsel %vm324, %v304, 0
        %v410 = vsel %vm324, %v305, 0
        %v413 = vsel %vm324, %v306, 0
        %v416 = vsel %vm324, %v307, 0
        %v419 = vsel %vm324, %v308, 0
        %vm421 = vcmask 1043456
        %v422 = vsel %vm421, %v309, 0
        %v424 = vsel %vm421, %v323, 0
        %426 = vmatprep.subr.mxu0 0.0
        %427 = vmatpush1.msra.mxu0 0.0
        %428 = vmatprep.subr.mxu0 0.0
        %429 = vmatpush1.msra.mxu0 0.0
        %430 = vmatprep.subr.mxu0 0.0
        %431 = vmatpush1.msra.mxu0 0.0
        %432 = vmatprep.subr.mxu0 0.0
        %433 = vmatpush1.msra.mxu0 0.0
        %434 = vmatprep.subr.mxu0 0.0
        %435 = vmatpush1.msra.mxu0 0.0
        %436 = vmatprep.subr.mxu0 0.0
        %437 = vmatpush1.msra.mxu0 0.0
        %438 = vmatprep.subr.mxu0 0.0
        %439 = vmatpush1.msra.mxu0 0.0
        %440 = vmatprep.subr.mxu0 0.0
        %441 = vmatpush1.msra.mxu0 0.0
        %442 = vmatprep.subr.mxu0 0.0
        %443 = vmatpush1.msra.mxu0 0.0
        %444 = vmatprep.subr.mxu0 0.0
        %445 = vmatpush1.msra.mxu0 0.0
        %446 = vmatprep.subr.mxu0 0.0
        %447 = vmatpush1.msra.mxu0 0.0
        %448 = vmatprep.subr.mxu0 0.0
        %449 = vmatpush1.msra.mxu0 0.0
        %450 = vmatprep.subr.mxu0 0.0
        %451 = vmatpush1.msra.mxu0 0.0
        %452 = vmatprep.subr.mxu0 0.0
        %453 = vmatpush1.msra.mxu0 0.0
        %454 = vmatprep.subr.mxu0 0.0
        %455 = vmatpush1.msra.mxu0 0.0
        %456 = vmatprep.subr.mxu0 %v424
        %457 = vmatpush1.msra.mxu0 %v422
        %458 = vmatprep.subr.mxu0 0.0
        %459 = vmatpush2.msra.mxu0 0.0
        %460 = vmatprep.subr.mxu0 0.0
        %461 = vmatpush2.msra.mxu0 0.0
        %462 = vmatprep.subr.mxu0 0.0
        %463 = vmatpush2.msra.mxu0 0.0
        %464 = vmatprep.subr.mxu0 0.0
        %465 = vmatpush2.msra.mxu0 0.0
        %466 = vmatprep.subr.mxu0 0.0
        %467 = vmatpush2.msra.mxu0 0.0
        %468 = vmatprep.subr.mxu0 0.0
        %469 = vmatpush2.msra.mxu0 0.0
        %470 = vmatprep.subr.mxu0 0.0
        %471 = vmatpush2.msra.mxu0 0.0
        %472 = vmatprep.subr.mxu0 0.0
        %473 = vmatpush2.msra.mxu0 0.0
        %474 = vmatprep.subr.mxu0 0.0
        %475 = vmatpush2.msra.mxu0 0.0
        %476 = vmatprep.subr.mxu0 0.0
        %477 = vmatpush2.msra.mxu0 0.0
        %478 = vmatprep.subr.mxu0 0.0
        %479 = vmatpush2.msra.mxu0 0.0
        %480 = vmatprep.subr.mxu0 0.0
        %481 = vmatpush2.msra.mxu0 0.0
        %482 = vmatprep.subr.mxu0 0.0
        %483 = vmatpush2.msra.mxu0 0.0
        %484 = vmatprep.subr.mxu0 0.0
        %485 = vmatpush2.msra.mxu0 0.0
        %486 = vmatprep.subr.mxu0 0.0
        %487 = vmatpush2.msra.mxu0 0.0
        %488 = vmatprep.subr.mxu0 0.0
        %489 = vmatpush2.msra.mxu0 0.0
        %490 = vmatprep.mubr.f32.mxu0 0.0
        %491 = vmatmul.mubr.f32.gmra.mxu0 %v326
        %v492 = vpop.f32.mrf.mxu0
        %v493 = vadd.f32 %v315, %v492
        %v494 = vpop.f32.mrf.mxu0
        %v495 = vadd.f32 %v319, %v494
        %496 = vmatprep.mubr.f32.mxu0 0.0
        %497 = vmatmul.mubr.f32.gmra.mxu0 %v329
        %v498 = vpop.f32.mrf.mxu0
        %v499 = vadd.f32 %v315, %v498
        %v500 = vpop.f32.mrf.mxu0
        %v501 = vadd.f32 %v319, %v500
        %502 = vmatprep.mubr.f32.mxu0 0.0
        %503 = vmatmul.mubr.f32.gmra.mxu0 %v332
        %v504 = vpop.f32.mrf.mxu0
        %v505 = vadd.f32 %v315, %v504
        %v506 = vpop.f32.mrf.mxu0
        %v507 = vadd.f32 %v319, %v506
        %508 = vmatprep.mubr.f32.mxu0 0.0
        %509 = vmatmul.mubr.f32.gmra.mxu0 %v335
        %v510 = vpop.f32.mrf.mxu0
        %v511 = vadd.f32 %v315, %v510
        %v512 = vpop.f32.mrf.mxu0
        %v513 = vadd.f32 %v319, %v512
        %514 = vmatprep.mubr.f32.mxu0 0.0
        %515 = vmatmul.mubr.f32.gmra.mxu0 %v338
        %v516 = vpop.f32.mrf.mxu0
        %v517 = vadd.f32 %v315, %v516
        %v518 = vpop.f32.mrf.mxu0
        %v519 = vadd.f32 %v319, %v518
        %520 = vmatprep.mubr.f32.mxu0 0.0
        %521 = vmatmul.mubr.f32.gmra.mxu0 %v341
        %v522 = vpop.f32.mrf.mxu0
        %v523 = vadd.f32 %v315, %v522
        %v524 = vpop.f32.mrf.mxu0
        %v525 = vadd.f32 %v319, %v524
        %526 = vmatprep.mubr.f32.mxu0 0.0
        %527 = vmatmul.mubr.f32.gmra.mxu0 %v344
        %v528 = vpop.f32.mrf.mxu0
        %v529 = vadd.f32 %v315, %v528
        %v530 = vpop.f32.mrf.mxu0
        %v531 = vadd.f32 %v319, %v530
        %532 = vmatprep.mubr.f32.mxu0 0.0
        %533 = vmatmul.mubr.f32.gmra.mxu0 %v347
        %v534 = vpop.f32.mrf.mxu0
        %v535 = vadd.f32 %v315, %v534
        %v536 = vpop.f32.mrf.mxu0
        %v537 = vadd.f32 %v319, %v536
        %538 = vmatprep.mubr.f32.mxu0 0.0
        %539 = vmatmul.mubr.f32.gmra.mxu0 %v350
        %v540 = vpop.f32.mrf.mxu0
        %v541 = vadd.f32 %v315, %v540
        %v542 = vpop.f32.mrf.mxu0
        %v543 = vadd.f32 %v319, %v542
        %544 = vmatprep.mubr.f32.mxu0 0.0
        %545 = vmatmul.mubr.f32.gmra.mxu0 %v353
        %v546 = vpop.f32.mrf.mxu0
        %v547 = vadd.f32 %v315, %v546
        %v548 = vpop.f32.mrf.mxu0
        %v549 = vadd.f32 %v319, %v548
        %550 = vmatprep.mubr.f32.mxu0 0.0
        %551 = vmatmul.mubr.f32.gmra.mxu0 %v356
        %v552 = vpop.f32.mrf.mxu0
        %v553 = vadd.f32 %v315, %v552
        %v554 = vpop.f32.mrf.mxu0
        %v555 = vadd.f32 %v319, %v554
        %556 = vmatprep.mubr.f32.mxu0 0.0
        %557 = vmatmul.mubr.f32.gmra.mxu0 %v359
        %v558 = vpop.f32.mrf.mxu0
        %v559 = vadd.f32 %v315, %v558
        %v560 = vpop.f32.mrf.mxu0
        %v561 = vadd.f32 %v319, %v560
        %562 = vmatprep.mubr.f32.mxu0 0.0
        %563 = vmatmul.mubr.f32.gmra.mxu0 %v362
        %v564 = vpop.f32.mrf.mxu0
        %v565 = vadd.f32 %v315, %v564
        %v566 = vpop.f32.mrf.mxu0
        %v567 = vadd.f32 %v319, %v566
        %568 = vmatprep.mubr.f32.mxu0 0.0
        %569 = vmatmul.mubr.f32.gmra.mxu0 %v365
        %v570 = vpop.f32.mrf.mxu0
        %v571 = vadd.f32 %v315, %v570
        %v572 = vpop.f32.mrf.mxu0
        %v573 = vadd.f32 %v319, %v572
        %574 = vmatprep.mubr.f32.mxu0 0.0
        %575 = vmatmul.mubr.f32.gmra.mxu0 %v368
        %v576 = vpop.f32.mrf.mxu0
        %v577 = vadd.f32 %v315, %v576
        %v578 = vpop.f32.mrf.mxu0
        %v579 = vadd.f32 %v319, %v578
        %580 = vmatprep.mubr.f32.mxu0 0.0
        %581 = vmatmul.mubr.f32.gmra.mxu0 %v371
        %v582 = vpop.f32.mrf.mxu0
        %v583 = vadd.f32 %v315, %v582
        %v584 = vpop.f32.mrf.mxu0
        %v585 = vadd.f32 %v319, %v584
        %586 = vmatprep.mubr.f32.mxu0 0.0
        %587 = vmatmul.mubr.f32.gmra.mxu0 %v374
        %v588 = vpop.f32.mrf.mxu0
        %v589 = vadd.f32 %v315, %v588
        %v590 = vpop.f32.mrf.mxu0
        %v591 = vadd.f32 %v319, %v590
        %592 = vmatprep.mubr.f32.mxu0 0.0
        %593 = vmatmul.mubr.f32.gmra.mxu0 %v377
        %v594 = vpop.f32.mrf.mxu0
        %v595 = vadd.f32 %v315, %v594
        %v596 = vpop.f32.mrf.mxu0
        %v597 = vadd.f32 %v319, %v596
        %598 = vmatprep.mubr.f32.mxu0 0.0
        %599 = vmatmul.mubr.f32.gmra.mxu0 %v380
        %v600 = vpop.f32.mrf.mxu0
        %v601 = vadd.f32 %v315, %v600
        %v602 = vpop.f32.mrf.mxu0
        %v603 = vadd.f32 %v319, %v602
        %604 = vmatprep.mubr.f32.mxu0 0.0
        %605 = vmatmul.mubr.f32.gmra.mxu0 %v383
        %v606 = vpop.f32.mrf.mxu0
        %v607 = vadd.f32 %v315, %v606
        %v608 = vpop.f32.mrf.mxu0
        %v609 = vadd.f32 %v319, %v608
        %610 = vmatprep.mubr.f32.mxu0 0.0
        %611 = vmatmul.mubr.f32.gmra.mxu0 %v386
        %v612 = vpop.f32.mrf.mxu0
        %v613 = vadd.f32 %v315, %v612
        %v614 = vpop.f32.mrf.mxu0
        %v615 = vadd.f32 %v319, %v614
        %616 = vmatprep.mubr.f32.mxu0 0.0
        %617 = vmatmul.mubr.f32.gmra.mxu0 %v389
        %v618 = vpop.f32.mrf.mxu0
        %v619 = vadd.f32 %v315, %v618
        %v620 = vpop.f32.mrf.mxu0
        %v621 = vadd.f32 %v319, %v620
        %622 = vmatprep.mubr.f32.mxu0 0.0
        %623 = vmatmul.mubr.f32.gmra.mxu0 %v392
        %v624 = vpop.f32.mrf.mxu0
        %v625 = vadd.f32 %v315, %v624
        %v626 = vpop.f32.mrf.mxu0
        %v627 = vadd.f32 %v319, %v626
        %628 = vmatprep.mubr.f32.mxu0 0.0
        %629 = vmatmul.mubr.f32.gmra.mxu0 %v395
        %v630 = vpop.f32.mrf.mxu0
        %v631 = vadd.f32 %v315, %v630
        %v632 = vpop.f32.mrf.mxu0
        %v633 = vadd.f32 %v319, %v632
        %634 = vmatprep.mubr.f32.mxu0 0.0
        %635 = vmatmul.mubr.f32.gmra.mxu0 %v398
        %v636 = vpop.f32.mrf.mxu0
        %v637 = vadd.f32 %v315, %v636
        %v638 = vpop.f32.mrf.mxu0
        %v639 = vadd.f32 %v319, %v638
        %640 = vmatprep.mubr.f32.mxu0 0.0
        %641 = vmatmul.mubr.f32.gmra.mxu0 %v401
        %v642 = vpop.f32.mrf.mxu0
        %v643 = vadd.f32 %v315, %v642
        %v644 = vpop.f32.mrf.mxu0
        %v645 = vadd.f32 %v319, %v644
        %646 = vmatprep.mubr.f32.mxu0 0.0
        %647 = vmatmul.mubr.f32.gmra.mxu0 %v404
        %v648 = vpop.f32.mrf.mxu0
        %v649 = vadd.f32 %v315, %v648
        %v650 = vpop.f32.mrf.mxu0
        %v651 = vadd.f32 %v319, %v650
        %652 = vmatprep.mubr.f32.mxu0 0.0
        %653 = vmatmul.mubr.f32.gmra.mxu0 %v407
        %v654 = vpop.f32.mrf.mxu0
        %v655 = vadd.f32 %v315, %v654
        %v656 = vpop.f32.mrf.mxu0
        %v657 = vadd.f32 %v319, %v656
        %658 = vmatprep.mubr.f32.mxu0 0.0
        %659 = vmatmul.mubr.f32.gmra.mxu0 %v410
        %v660 = vpop.f32.mrf.mxu0
        %v661 = vadd.f32 %v315, %v660
        %v662 = vpop.f32.mrf.mxu0
        %v663 = vadd.f32 %v319, %v662
        %664 = vmatprep.mubr.f32.mxu0 0.0
        %665 = vmatmul.mubr.f32.gmra.mxu0 %v413
        %v666 = vpop.f32.mrf.mxu0
        %v667 = vadd.f32 %v315, %v666
        %v668 = vpop.f32.mrf.mxu0
        %v669 = vadd.f32 %v319, %v668
        %670 = vmatprep.mubr.f32.mxu0 0.0
        %671 = vmatmul.mubr.f32.gmra.mxu0 %v416
        %v672 = vpop.f32.mrf.mxu0
        %v673 = vadd.f32 %v315, %v672
        %v674 = vpop.f32.mrf.mxu0
        %v675 = vadd.f32 %v319, %v674
        %676 = vmatprep.mubr.f32.mxu0 0.0
        %677 = vmatmul.mubr.f32.gmra.mxu0 %v419
        %v678 = vpop.f32.mrf.mxu0
        %v679 = vadd.f32 %v315, %v678
        %v680 = vpop.f32.mrf.mxu0
        %v681 = vadd.f32 %v319, %v680
        %682 = vdwg.mxu0
        %v683 = vmax.f32 %v493, 0.0
        %v684 = vmax.f32 %v495, 0.0
        %v685 = vmax.f32 %v499, 0.0
        %v686 = vmax.f32 %v501, 0.0
        %v687 = vmax.f32 %v505, 0.0
        %v688 = vmax.f32 %v507, 0.0
        %v689 = vmax.f32 %v511, 0.0
        %v690 = vmax.f32 %v513, 0.0
        %v691 = vmax.f32 %v517, 0.0
        %v692 = vmax.f32 %v519, 0.0
        %v693 = vmax.f32 %v523, 0.0
        %v694 = vmax.f32 %v525, 0.0
        %v695 = vmax.f32 %v529, 0.0
        %v696 = vmax.f32 %v531, 0.0
        %v697 = vmax.f32 %v535, 0.0
        %v698 = vmax.f32 %v537, 0.0
        %v699 = vmax.f32 %v541, 0.0
        %v700 = vmax.f32 %v543, 0.0
        %v701 = vmax.f32 %v547, 0.0
        %v702 = vmax.f32 %v549, 0.0
        %v703 = vmax.f32 %v553, 0.0
        %v704 = vmax.f32 %v555, 0.0
        %v705 = vmax.f32 %v559, 0.0
        %v706 = vmax.f32 %v561, 0.0
        %v707 = vmax.f32 %v565, 0.0
        %v708 = vmax.f32 %v567, 0.0
        %v709 = vmax.f32 %v571, 0.0
        %v710 = vmax.f32 %v573, 0.0
        %v711 = vmax.f32 %v577, 0.0
        %v712 = vmax.f32 %v579, 0.0
        %v713 = vmax.f32 %v583, 0.0
        %v714 = vmax.f32 %v585, 0.0
        %v715 = vmax.f32 %v589, 0.0
        %v716 = vmax.f32 %v591, 0.0
        %v717 = vmax.f32 %v595, 0.0
        %v718 = vmax.f32 %v597, 0.0
        %v719 = vmax.f32 %v601, 0.0
        %v720 = vmax.f32 %v603, 0.0
        %v721 = vmax.f32 %v607, 0.0
        %v722 = vmax.f32 %v609, 0.0
        %v723 = vmax.f32 %v613, 0.0
        %v724 = vmax.f32 %v615, 0.0
        %v725 = vmax.f32 %v619, 0.0
        %v726 = vmax.f32 %v621, 0.0
        %v727 = vmax.f32 %v625, 0.0
        %v728 = vmax.f32 %v627, 0.0
        %v729 = vmax.f32 %v631, 0.0
        %v730 = vmax.f32 %v633, 0.0
        %v731 = vmax.f32 %v637, 0.0
        %v732 = vmax.f32 %v639, 0.0
        %v733 = vmax.f32 %v643, 0.0
        %v734 = vmax.f32 %v645, 0.0
        %v735 = vmax.f32 %v649, 0.0
        %v736 = vmax.f32 %v651, 0.0
        %v737 = vmax.f32 %v655, 0.0
        %v738 = vmax.f32 %v657, 0.0
        %v739 = vmax.f32 %v661, 0.0
        %v740 = vmax.f32 %v663, 0.0
        %v741 = vmax.f32 %v667, 0.0
        %v742 = vmax.f32 %v669, 0.0
        %v743 = vmax.f32 %v673, 0.0
        %v744 = vmax.f32 %v675, 0.0
        %v745 = vmax.f32 %v679, 0.0
        %v746 = vmax.f32 %v681, 0.0
        %vm747 = vcmask 523264
        %748 = vst.msk [vmem:[#allocation2] sm:$0xff] %vm747, 0.0
        %749 = vst.msk [vmem:[#allocation2 + $0x8] sm:$0xff] %vm747, 0.0
        %vm750 = vcmask 517120
        %751 = vst.msk [vmem:[#allocation2 + $0x10] sm:$0x3] %vm750, 0.0
        %752 = vst.msk [vmem:[#allocation2 + $0x18] sm:$0xff] %vm747, 0.0
        %753 = vst.msk [vmem:[#allocation2 + $0x20] sm:$0xff] %vm747, 0.0
        %754 = vst.msk [vmem:[#allocation2 + $0x28] sm:$0x3] %vm750, 0.0
        %755 = vst.msk [vmem:[#allocation2 + $0x30] sm:$0xff] %vm747, 0.0
        %756 = vst.msk [vmem:[#allocation2 + $0x38] sm:$0xff] %vm747, 0.0
        %757 = vst.msk [vmem:[#allocation2 + $0x40] sm:$0x3] %vm750, 0.0
        %758 = vst.msk [vmem:[#allocation2 + $0x48] sm:$0xff] %vm747, 0.0
        %759 = vst.msk [vmem:[#allocation2 + $0x50] sm:$0xff] %vm747, 0.0
        %760 = vst.msk [vmem:[#allocation2 + $0x58] sm:$0x3] %vm750, 0.0
        %761 = vst.msk [vmem:[#allocation2 + $0x60] sm:$0xff] %vm747, 0.0
        %762 = vst.msk [vmem:[#allocation2 + $0x68] sm:$0xff] %vm747, 0.0
        %763 = vst.msk [vmem:[#allocation2 + $0x70] sm:$0x3] %vm750, 0.0
        %764 = vst.msk [vmem:[#allocation2 + $0x78] sm:$0xff] %vm747, 0.0
        %765 = vst.msk [vmem:[#allocation2 + $0x80] sm:$0xff] %vm747, 0.0
        %766 = vst.msk [vmem:[#allocation2 + $0x88] sm:$0x3] %vm750, 0.0
        %767 = vst.msk [vmem:[#allocation2 + $0x90] sm:$0xff] %vm747, 0.0
        %768 = vst.msk [vmem:[#allocation2 + $0x98] sm:$0xff] %vm747, 0.0
        %769 = vst.msk [vmem:[#allocation2 + $0xa0] sm:$0x3] %vm750, 0.0
        %770 = vst.msk [vmem:[#allocation2 + $0xa8] sm:$0xff] %vm747, 0.0
        %771 = vst.msk [vmem:[#allocation2 + $0xb0] sm:$0xff] %vm747, 0.0
        %772 = vst.msk [vmem:[#allocation2 + $0xb8] sm:$0x3] %vm750, 0.0
        %773 = vst.msk [vmem:[#allocation2 + $0xc0] sm:$0xff] %vm747, 0.0
        %774 = vst.msk [vmem:[#allocation2 + $0xc8] sm:$0xff] %vm747, 0.0
        %775 = vst.msk [vmem:[#allocation2 + $0xd0] sm:$0x3] %vm750, 0.0
        %776 = vst.msk [vmem:[#allocation2 + $0xd8] sm:$0xff] %vm747, 0.0
        %777 = vst.msk [vmem:[#allocation2 + $0xe0] sm:$0xff] %vm747, 0.0
        %778 = vst.msk [vmem:[#allocation2 + $0xe8] sm:$0x3] %vm750, 0.0
        %779 = vst.msk [vmem:[#allocation2 + $0xf0] sm:$0xff] %vm747, 0.0
        %780 = vst.msk [vmem:[#allocation2 + $0xf8] sm:$0xff] %vm747, 0.0
        %781 = vst.msk [vmem:[#allocation2 + $0x100] sm:$0x3] %vm750, 0.0
        %782 = vst.msk [vmem:[#allocation2 + $0x108] sm:$0xff] %vm747, 0.0
        %783 = vst.msk [vmem:[#allocation2 + $0x110] sm:$0xff] %vm747, 0.0
        %784 = vst.msk [vmem:[#allocation2 + $0x118] sm:$0x3] %vm750, 0.0
        %785 = vst.msk [vmem:[#allocation2 + $0x120] sm:$0xff] %vm747, 0.0
        %786 = vst.msk [vmem:[#allocation2 + $0x128] sm:$0xff] %vm747, 0.0
        %787 = vst.msk [vmem:[#allocation2 + $0x130] sm:$0x3] %vm750, 0.0
        %788 = vst.msk [vmem:[#allocation2 + $0x138] sm:$0xff] %vm747, 0.0
        %789 = vst.msk [vmem:[#allocation2 + $0x140] sm:$0xff] %vm747, 0.0
        %790 = vst.msk [vmem:[#allocation2 + $0x148] sm:$0x3] %vm750, 0.0
        %791 = vst.msk [vmem:[#allocation2 + $0x150] sm:$0xff] %vm747, 0.0
        %792 = vst.msk [vmem:[#allocation2 + $0x158] sm:$0xff] %vm747, 0.0
        %793 = vst.msk [vmem:[#allocation2 + $0x160] sm:$0x3] %vm750, 0.0
        %794 = vst.msk [vmem:[#allocation2 + $0x168] sm:$0xff] %vm747, 0.0
        %795 = vst.msk [vmem:[#allocation2 + $0x170] sm:$0xff] %vm747, 0.0
        %796 = vst.msk [vmem:[#allocation2 + $0x178] sm:$0x3] %vm750, 0.0
        %797 = vst.msk [vmem:[#allocation2 + $0x180] sm:$0xff] %vm747, 0.0
        %798 = vst.msk [vmem:[#allocation2 + $0x188] sm:$0xff] %vm747, 0.0
        %799 = vst.msk [vmem:[#allocation2 + $0x190] sm:$0x3] %vm750, 0.0
        %800 = vst.msk [vmem:[#allocation2 + $0x198] sm:$0xff] %vm747, 0.0
        %801 = vst.msk [vmem:[#allocation2 + $0x1a0] sm:$0xff] %vm747, 0.0
        %802 = vst.msk [vmem:[#allocation2 + $0x1a8] sm:$0x3] %vm750, 0.0
        %s803 = scalar_lea.vmem [#allocation2], 24
        %804 = vst.msk [vmem:[%s803 + $0x1] sm:$0xff] %vm747, %v684
        %805 = vst.msk [vmem:[%s803 + $0x9] sm:$0xff] %vm747, %v686
        %806 = vst.msk [vmem:[%s803 + $0x19] sm:$0xff] %vm747, %v688
        %807 = vst.msk [vmem:[%s803 + $0x21] sm:$0xff] %vm747, %v690
        %808 = vst.msk [vmem:[%s803 + $0x31] sm:$0xff] %vm747, %v692
        %809 = vst.msk [vmem:[%s803 + $0x39] sm:$0xff] %vm747, %v694
        %810 = vst.msk [vmem:[%s803 + $0x49] sm:$0xff] %vm747, %v696
        %811 = vst.msk [vmem:[%s803 + $0x51] sm:$0xff] %vm747, %v698
        %812 = vst.msk [vmem:[%s803 + $0x61] sm:$0xff] %vm747, %v700
        %813 = vst.msk [vmem:[%s803 + $0x69] sm:$0xff] %vm747, %v702
        %814 = vst.msk [vmem:[%s803 + $0x79] sm:$0xff] %vm747, %v704
        %815 = vst.msk [vmem:[%s803 + $0x81] sm:$0xff] %vm747, %v706
        %816 = vst.msk [vmem:[%s803 + $0x91] sm:$0xff] %vm747, %v708
        %817 = vst.msk [vmem:[%s803 + $0x99] sm:$0xff] %vm747, %v710
        %818 = vst.msk [vmem:[%s803 + $0xa9] sm:$0xff] %vm747, %v712
        %819 = vst.msk [vmem:[%s803 + $0xb1] sm:$0xff] %vm747, %v714
        %820 = vst.msk [vmem:[%s803 + $0xc1] sm:$0xff] %vm747, %v716
        %821 = vst.msk [vmem:[%s803 + $0xc9] sm:$0xff] %vm747, %v718
        %822 = vst.msk [vmem:[%s803 + $0xd9] sm:$0xff] %vm747, %v720
        %823 = vst.msk [vmem:[%s803 + $0xe1] sm:$0xff] %vm747, %v722
        %824 = vst.msk [vmem:[%s803 + $0xf1] sm:$0xff] %vm747, %v724
        %825 = vst.msk [vmem:[%s803 + $0xf9] sm:$0xff] %vm747, %v726
        %826 = vst.msk [vmem:[%s803 + $0x109] sm:$0xff] %vm747, %v728
        %827 = vst.msk [vmem:[%s803 + $0x111] sm:$0xff] %vm747, %v730
        %828 = vst.msk [vmem:[%s803 + $0x121] sm:$0xff] %vm747, %v732
        %829 = vst.msk [vmem:[%s803 + $0x129] sm:$0xff] %vm747, %v734
        %830 = vst.msk [vmem:[%s803 + $0x139] sm:$0xff] %vm747, %v736
        %831 = vst.msk [vmem:[%s803 + $0x141] sm:$0xff] %vm747, %v738
        %832 = vst.msk [vmem:[%s803 + $0x151] sm:$0xff] %vm747, %v740
        %833 = vst.msk [vmem:[%s803 + $0x159] sm:$0xff] %vm747, %v742
        %834 = vst.msk [vmem:[%s803 + $0x169] sm:$0xff] %vm747, %v744
        %835 = vst.msk [vmem:[%s803 + $0x171] sm:$0xff] %vm747, %v746
        %v836 = vld [vmem:[#allocation2] sm:$0xff]
        %v837 = vld [vmem:[#allocation2 + $0x8] sm:$0xff]
        %v838 = vld [vmem:[#allocation2 + $0x18] sm:$0xff]
        %v839 = vld [vmem:[#allocation2 + $0x20] sm:$0xff]
        %v840 = vld [vmem:[#allocation2 + $0x30] sm:$0xff]
        %v841 = vld [vmem:[#allocation2 + $0x38] sm:$0xff]
        %v842 = vld [vmem:[#allocation2 + $0x48] sm:$0xff]
        %v843 = vld [vmem:[#allocation2 + $0x50] sm:$0xff]
        %v844 = vld [vmem:[#allocation2 + $0x60] sm:$0xff]
        %v845 = vld [vmem:[#allocation2 + $0x68] sm:$0xff]
        %v846 = vld [vmem:[#allocation2 + $0x78] sm:$0xff]
        %v847 = vld [vmem:[#allocation2 + $0x80] sm:$0xff]
        %v848 = vld [vmem:[#allocation2 + $0x90] sm:$0xff]
        %v849 = vld [vmem:[#allocation2 + $0x98] sm:$0xff]
        %v850 = vld [vmem:[#allocation2 + $0xa8] sm:$0xff]
        %v851 = vld [vmem:[#allocation2 + $0xb0] sm:$0xff]
        %v852 = vld [vmem:[#allocation2 + $0xc0] sm:$0xff]
        %v853 = vld [vmem:[#allocation2 + $0xc8] sm:$0xff]
        %v854 = vld [vmem:[#allocation2 + $0xd8] sm:$0xff]
        %v855 = vld [vmem:[#allocation2 + $0xe0] sm:$0xff]
        %v856 = vld [vmem:[#allocation2 + $0xf0] sm:$0xff]
        %v857 = vld [vmem:[#allocation2 + $0xf8] sm:$0xff]
        %v858 = vld [vmem:[#allocation2 + $0x108] sm:$0xff]
        %v859 = vld [vmem:[#allocation2 + $0x110] sm:$0xff]
        %v860 = vld [vmem:[#allocation2 + $0x120] sm:$0xff]
        %v861 = vld [vmem:[#allocation2 + $0x128] sm:$0xff]
        %v862 = vld [vmem:[#allocation2 + $0x138] sm:$0xff]
        %v863 = vld [vmem:[#allocation2 + $0x140] sm:$0xff]
        %v864 = vld [vmem:[#allocation2 + $0x150] sm:$0xff]
        %v865 = vld [vmem:[#allocation2 + $0x158] sm:$0xff]
        %v866 = vld [vmem:[#allocation2 + $0x168] sm:$0xff]
        %v867 = vld [vmem:[#allocation2 + $0x170] sm:$0xff]
        %v868 = vld [vmem:[#allocation2 + $0x1] sm:$0xff]
        %v869 = vld [vmem:[#allocation2 + $0x9] sm:$0xff]
        %v870 = vld [vmem:[#allocation2 + $0x19] sm:$0xff]
        %v871 = vld [vmem:[#allocation2 + $0x21] sm:$0xff]
        %v872 = vld [vmem:[#allocation2 + $0x31] sm:$0xff]
        %v873 = vld [vmem:[#allocation2 + $0x39] sm:$0xff]
        %v874 = vld [vmem:[#allocation2 + $0x49] sm:$0xff]
        %v875 = vld [vmem:[#allocation2 + $0x51] sm:$0xff]
        %v876 = vld [vmem:[#allocation2 + $0x61] sm:$0xff]
        %v877 = vld [vmem:[#allocation2 + $0x69] sm:$0xff]
        %v878 = vld [vmem:[#allocation2 + $0x79] sm:$0xff]
        %v879 = vld [vmem:[#allocation2 + $0x81] sm:$0xff]
        %v880 = vld [vmem:[#allocation2 + $0x91] sm:$0xff]
        %v881 = vld [vmem:[#allocation2 + $0x99] sm:$0xff]
        %v882 = vld [vmem:[#allocation2 + $0xa9] sm:$0xff]
        %v883 = vld [vmem:[#allocation2 + $0xb1] sm:$0xff]
        %v884 = vld [vmem:[#allocation2 + $0xc1] sm:$0xff]
        %v885 = vld [vmem:[#allocation2 + $0xc9] sm:$0xff]
        %v886 = vld [vmem:[#allocation2 + $0xd9] sm:$0xff]
        %v887 = vld [vmem:[#allocation2 + $0xe1] sm:$0xff]
        %v888 = vld [vmem:[#allocation2 + $0xf1] sm:$0xff]
        %v889 = vld [vmem:[#allocation2 + $0xf9] sm:$0xff]
        %v890 = vld [vmem:[#allocation2 + $0x109] sm:$0xff]
        %v891 = vld [vmem:[#allocation2 + $0x111] sm:$0xff]
        %v892 = vld [vmem:[#allocation2 + $0x121] sm:$0xff]
        %v893 = vld [vmem:[#allocation2 + $0x129] sm:$0xff]
        %v894 = vld [vmem:[#allocation2 + $0x139] sm:$0xff]
        %v895 = vld [vmem:[#allocation2 + $0x141] sm:$0xff]
        %v896 = vld [vmem:[#allocation2 + $0x151] sm:$0xff]
        %v897 = vld [vmem:[#allocation2 + $0x159] sm:$0xff]
        %v898 = vld [vmem:[#allocation2 + $0x169] sm:$0xff]
        %v899 = vld [vmem:[#allocation2 + $0x171] sm:$0xff]
        %v900 = vld [vmem:[#allocation2 + $0x2] sm:$0xff]
        %v901 = vld [vmem:[#allocation2 + $0xa] sm:$0xff]
        %v902 = vld [vmem:[#allocation2 + $0x1a] sm:$0xff]
        %v903 = vld [vmem:[#allocation2 + $0x22] sm:$0xff]
        %v904 = vld [vmem:[#allocation2 + $0x32] sm:$0xff]
        %v905 = vld [vmem:[#allocation2 + $0x3a] sm:$0xff]
        %v906 = vld [vmem:[#allocation2 + $0x4a] sm:$0xff]
        %v907 = vld [vmem:[#allocation2 + $0x52] sm:$0xff]
        %v908 = vld [vmem:[#allocation2 + $0x62] sm:$0xff]
        %v909 = vld [vmem:[#allocation2 + $0x6a] sm:$0xff]
        %v910 = vld [vmem:[#allocation2 + $0x7a] sm:$0xff]
        %v911 = vld [vmem:[#allocation2 + $0x82] sm:$0xff]
        %v912 = vld [vmem:[#allocation2 + $0x92] sm:$0xff]
        %v913 = vld [vmem:[#allocation2 + $0x9a] sm:$0xff]
        %v914 = vld [vmem:[#allocation2 + $0xaa] sm:$0xff]
        %v915 = vld [vmem:[#allocation2 + $0xb2] sm:$0xff]
        %v916 = vld [vmem:[#allocation2 + $0xc2] sm:$0xff]
        %v917 = vld [vmem:[#allocation2 + $0xca] sm:$0xff]
        %v918 = vld [vmem:[#allocation2 + $0xda] sm:$0xff]
        %v919 = vld [vmem:[#allocation2 + $0xe2] sm:$0xff]
        %v920 = vld [vmem:[#allocation2 + $0xf2] sm:$0xff]
        %v921 = vld [vmem:[#allocation2 + $0xfa] sm:$0xff]
        %v922 = vld [vmem:[#allocation2 + $0x10a] sm:$0xff]
        %v923 = vld [vmem:[#allocation2 + $0x112] sm:$0xff]
        %v924 = vld [vmem:[#allocation2 + $0x122] sm:$0xff]
        %v925 = vld [vmem:[#allocation2 + $0x12a] sm:$0xff]
        %v926 = vld [vmem:[#allocation2 + $0x13a] sm:$0xff]
        %v927 = vld [vmem:[#allocation2 + $0x142] sm:$0xff]
        %v928 = vld [vmem:[#allocation2 + $0x152] sm:$0xff]
        %v929 = vld [vmem:[#allocation2 + $0x15a] sm:$0xff]
        %v930 = vld [vmem:[#allocation2 + $0x16a] sm:$0xff]
        %v931 = vld [vmem:[#allocation2 + $0x172] sm:$0xff]
        %v932 = vld [vmem:[%s803] sm:$0xff]
        %v933 = vld [vmem:[%s803 + $0x8] sm:$0xff]
        %v934 = vld [vmem:[%s803 + $0x18] sm:$0xff]
        %v935 = vld [vmem:[%s803 + $0x20] sm:$0xff]
        %v936 = vld [vmem:[%s803 + $0x30] sm:$0xff]
        %v937 = vld [vmem:[%s803 + $0x38] sm:$0xff]
        %v938 = vld [vmem:[%s803 + $0x48] sm:$0xff]
        %v939 = vld [vmem:[%s803 + $0x50] sm:$0xff]
        %v940 = vld [vmem:[%s803 + $0x60] sm:$0xff]
        %v941 = vld [vmem:[%s803 + $0x68] sm:$0xff]
        %v942 = vld [vmem:[%s803 + $0x78] sm:$0xff]
        %v943 = vld [vmem:[%s803 + $0x80] sm:$0xff]
        %v944 = vld [vmem:[%s803 + $0x90] sm:$0xff]
        %v945 = vld [vmem:[%s803 + $0x98] sm:$0xff]
        %v946 = vld [vmem:[%s803 + $0xa8] sm:$0xff]
        %v947 = vld [vmem:[%s803 + $0xb0] sm:$0xff]
        %v948 = vld [vmem:[%s803 + $0xc0] sm:$0xff]
        %v949 = vld [vmem:[%s803 + $0xc8] sm:$0xff]
        %v950 = vld [vmem:[%s803 + $0xd8] sm:$0xff]
        %v951 = vld [vmem:[%s803 + $0xe0] sm:$0xff]
        %v952 = vld [vmem:[%s803 + $0xf0] sm:$0xff]
        %v953 = vld [vmem:[%s803 + $0xf8] sm:$0xff]
        %v954 = vld [vmem:[%s803 + $0x108] sm:$0xff]
        %v955 = vld [vmem:[%s803 + $0x110] sm:$0xff]
        %v956 = vld [vmem:[%s803 + $0x120] sm:$0xff]
        %v957 = vld [vmem:[%s803 + $0x128] sm:$0xff]
        %v958 = vld [vmem:[%s803 + $0x138] sm:$0xff]
        %v959 = vld [vmem:[%s803 + $0x140] sm:$0xff]
        %v960 = vld [vmem:[%s803 + $0x150] sm:$0xff]
        %v961 = vld [vmem:[%s803 + $0x158] sm:$0xff]
        %v962 = vld [vmem:[%s803 + $0x168] sm:$0xff]
        %v963 = vld [vmem:[%s803 + $0x170] sm:$0xff]
        %v964 = vld [vmem:[%s803 + $0x1] sm:$0xff]
        %v965 = vld [vmem:[%s803 + $0x9] sm:$0xff]
        %v966 = vld [vmem:[%s803 + $0x19] sm:$0xff]
        %v967 = vld [vmem:[%s803 + $0x21] sm:$0xff]
        %v968 = vld [vmem:[%s803 + $0x31] sm:$0xff]
        %v969 = vld [vmem:[%s803 + $0x39] sm:$0xff]
        %v970 = vld [vmem:[%s803 + $0x49] sm:$0xff]
        %v971 = vld [vmem:[%s803 + $0x51] sm:$0xff]
        %v972 = vld [vmem:[%s803 + $0x61] sm:$0xff]
        %v973 = vld [vmem:[%s803 + $0x69] sm:$0xff]
        %v974 = vld [vmem:[%s803 + $0x79] sm:$0xff]
        %v975 = vld [vmem:[%s803 + $0x81] sm:$0xff]
        %v976 = vld [vmem:[%s803 + $0x91] sm:$0xff]
        %v977 = vld [vmem:[%s803 + $0x99] sm:$0xff]
        %v978 = vld [vmem:[%s803 + $0xa9] sm:$0xff]
        %v979 = vld [vmem:[%s803 + $0xb1] sm:$0xff]
        %v980 = vld [vmem:[%s803 + $0xc1] sm:$0xff]
        %v981 = vld [vmem:[%s803 + $0xc9] sm:$0xff]
        %v982 = vld [vmem:[%s803 + $0xd9] sm:$0xff]
        %v983 = vld [vmem:[%s803 + $0xe1] sm:$0xff]
        %v984 = vld [vmem:[%s803 + $0xf1] sm:$0xff]
        %v985 = vld [vmem:[%s803 + $0xf9] sm:$0xff]
        %v986 = vld [vmem:[%s803 + $0x109] sm:$0xff]
        %v987 = vld [vmem:[%s803 + $0x111] sm:$0xff]
        %v988 = vld [vmem:[%s803 + $0x121] sm:$0xff]
        %v989 = vld [vmem:[%s803 + $0x129] sm:$0xff]
        %v990 = vld [vmem:[%s803 + $0x139] sm:$0xff]
        %v991 = vld [vmem:[%s803 + $0x141] sm:$0xff]
        %v992 = vld [vmem:[%s803 + $0x151] sm:$0xff]
        %v993 = vld [vmem:[%s803 + $0x159] sm:$0xff]
        %v994 = vld [vmem:[%s803 + $0x169] sm:$0xff]
        %v995 = vld [vmem:[%s803 + $0x171] sm:$0xff]
        %v996 = vld [vmem:[%s803 + $0x2] sm:$0xff]
        %v997 = vld [vmem:[%s803 + $0xa] sm:$0xff]
        %v998 = vld [vmem:[%s803 + $0x1a] sm:$0xff]
        %v999 = vld [vmem:[%s803 + $0x22] sm:$0xff]
        %v1000 = vld [vmem:[%s803 + $0x32] sm:$0xff]
        %v1001 = vld [vmem:[%s803 + $0x3a] sm:$0xff]
        %v1002 = vld [vmem:[%s803 + $0x4a] sm:$0xff]
        %v1003 = vld [vmem:[%s803 + $0x52] sm:$0xff]
        %v1004 = vld [vmem:[%s803 + $0x62] sm:$0xff]
        %v1005 = vld [vmem:[%s803 + $0x6a] sm:$0xff]
        %v1006 = vld [vmem:[%s803 + $0x7a] sm:$0xff]
        %v1007 = vld [vmem:[%s803 + $0x82] sm:$0xff]
        %v1008 = vld [vmem:[%s803 + $0x92] sm:$0xff]
        %v1009 = vld [vmem:[%s803 + $0x9a] sm:$0xff]
        %v1010 = vld [vmem:[%s803 + $0xaa] sm:$0xff]
        %v1011 = vld [vmem:[%s803 + $0xb2] sm:$0xff]
        %v1012 = vld [vmem:[%s803 + $0xc2] sm:$0xff]
        %v1013 = vld [vmem:[%s803 + $0xca] sm:$0xff]
        %v1014 = vld [vmem:[%s803 + $0xda] sm:$0xff]
        %v1015 = vld [vmem:[%s803 + $0xe2] sm:$0xff]
        %v1016 = vld [vmem:[%s803 + $0xf2] sm:$0xff]
        %v1017 = vld [vmem:[%s803 + $0xfa] sm:$0xff]
        %v1018 = vld [vmem:[%s803 + $0x10a] sm:$0xff]
        %v1019 = vld [vmem:[%s803 + $0x112] sm:$0xff]
        %v1020 = vld [vmem:[%s803 + $0x122] sm:$0xff]
        %v1021 = vld [vmem:[%s803 + $0x12a] sm:$0xff]
        %v1022 = vld [vmem:[%s803 + $0x13a] sm:$0xff]
        %v1023 = vld [vmem:[%s803 + $0x142] sm:$0xff]
        %v1024 = vld [vmem:[%s803 + $0x152] sm:$0xff]
        %v1025 = vld [vmem:[%s803 + $0x15a] sm:$0xff]
        %v1026 = vld [vmem:[%s803 + $0x16a] sm:$0xff]
        %v1027 = vld [vmem:[%s803 + $0x172] sm:$0xff]
        %s1028 = scalar_lea.vmem [#allocation2], 48
        %v1029 = vld [vmem:[%s1028] sm:$0xff]
        %v1030 = vld [vmem:[%s1028 + $0x8] sm:$0xff]
        %v1031 = vld [vmem:[%s1028 + $0x18] sm:$0xff]
        %v1032 = vld [vmem:[%s1028 + $0x20] sm:$0xff]
        %v1033 = vld [vmem:[%s1028 + $0x30] sm:$0xff]
        %v1034 = vld [vmem:[%s1028 + $0x38] sm:$0xff]
        %v1035 = vld [vmem:[%s1028 + $0x48] sm:$0xff]
        %v1036 = vld [vmem:[%s1028 + $0x50] sm:$0xff]
        %v1037 = vld [vmem:[%s1028 + $0x60] sm:$0xff]
        %v1038 = vld [vmem:[%s1028 + $0x68] sm:$0xff]
        %v1039 = vld [vmem:[%s1028 + $0x78] sm:$0xff]
        %v1040 = vld [vmem:[%s1028 + $0x80] sm:$0xff]
        %v1041 = vld [vmem:[%s1028 + $0x90] sm:$0xff]
        %v1042 = vld [vmem:[%s1028 + $0x98] sm:$0xff]
        %v1043 = vld [vmem:[%s1028 + $0xa8] sm:$0xff]
        %v1044 = vld [vmem:[%s1028 + $0xb0] sm:$0xff]
        %v1045 = vld [vmem:[%s1028 + $0xc0] sm:$0xff]
        %v1046 = vld [vmem:[%s1028 + $0xc8] sm:$0xff]
        %v1047 = vld [vmem:[%s1028 + $0xd8] sm:$0xff]
        %v1048 = vld [vmem:[%s1028 + $0xe0] sm:$0xff]
        %v1049 = vld [vmem:[%s1028 + $0xf0] sm:$0xff]
        %v1050 = vld [vmem:[%s1028 + $0xf8] sm:$0xff]
        %v1051 = vld [vmem:[%s1028 + $0x108] sm:$0xff]
        %v1052 = vld [vmem:[%s1028 + $0x110] sm:$0xff]
        %v1053 = vld [vmem:[%s1028 + $0x120] sm:$0xff]
        %v1054 = vld [vmem:[%s1028 + $0x128] sm:$0xff]
        %v1055 = vld [vmem:[%s1028 + $0x138] sm:$0xff]
        %v1056 = vld [vmem:[%s1028 + $0x140] sm:$0xff]
        %v1057 = vld [vmem:[%s1028 + $0x150] sm:$0xff]
        %v1058 = vld [vmem:[%s1028 + $0x158] sm:$0xff]
        %v1059 = vld [vmem:[%s1028 + $0x168] sm:$0xff]
        %v1060 = vld [vmem:[%s1028 + $0x170] sm:$0xff]
        %v1061 = vld [vmem:[%s1028 + $0x1] sm:$0xff]
        %v1062 = vld [vmem:[%s1028 + $0x9] sm:$0xff]
        %v1063 = vld [vmem:[%s1028 + $0x19] sm:$0xff]
        %v1064 = vld [vmem:[%s1028 + $0x21] sm:$0xff]
        %v1065 = vld [vmem:[%s1028 + $0x31] sm:$0xff]
        %v1066 = vld [vmem:[%s1028 + $0x39] sm:$0xff]
        %v1067 = vld [vmem:[%s1028 + $0x49] sm:$0xff]
        %v1068 = vld [vmem:[%s1028 + $0x51] sm:$0xff]
        %v1069 = vld [vmem:[%s1028 + $0x61] sm:$0xff]
        %v1070 = vld [vmem:[%s1028 + $0x69] sm:$0xff]
        %v1071 = vld [vmem:[%s1028 + $0x79] sm:$0xff]
        %v1072 = vld [vmem:[%s1028 + $0x81] sm:$0xff]
        %v1073 = vld [vmem:[%s1028 + $0x91] sm:$0xff]
        %v1074 = vld [vmem:[%s1028 + $0x99] sm:$0xff]
        %v1075 = vld [vmem:[%s1028 + $0xa9] sm:$0xff]
        %v1076 = vld [vmem:[%s1028 + $0xb1] sm:$0xff]
        %v1077 = vld [vmem:[%s1028 + $0xc1] sm:$0xff]
        %v1078 = vld [vmem:[%s1028 + $0xc9] sm:$0xff]
        %v1079 = vld [vmem:[%s1028 + $0xd9] sm:$0xff]
        %v1080 = vld [vmem:[%s1028 + $0xe1] sm:$0xff]
        %v1081 = vld [vmem:[%s1028 + $0xf1] sm:$0xff]
        %v1082 = vld [vmem:[%s1028 + $0xf9] sm:$0xff]
        %v1083 = vld [vmem:[%s1028 + $0x109] sm:$0xff]
        %v1084 = vld [vmem:[%s1028 + $0x111] sm:$0xff]
        %v1085 = vld [vmem:[%s1028 + $0x121] sm:$0xff]
        %v1086 = vld [vmem:[%s1028 + $0x129] sm:$0xff]
        %v1087 = vld [vmem:[%s1028 + $0x139] sm:$0xff]
        %v1088 = vld [vmem:[%s1028 + $0x141] sm:$0xff]
        %v1089 = vld [vmem:[%s1028 + $0x151] sm:$0xff]
        %v1090 = vld [vmem:[%s1028 + $0x159] sm:$0xff]
        %v1091 = vld [vmem:[%s1028 + $0x169] sm:$0xff]
        %v1092 = vld [vmem:[%s1028 + $0x171] sm:$0xff]
        %v1093 = vld [vmem:[%s1028 + $0x2] sm:$0xff]
        %v1094 = vld [vmem:[%s1028 + $0xa] sm:$0xff]
        %v1095 = vld [vmem:[%s1028 + $0x1a] sm:$0xff]
        %v1096 = vld [vmem:[%s1028 + $0x22] sm:$0xff]
        %v1097 = vld [vmem:[%s1028 + $0x32] sm:$0xff]
        %v1098 = vld [vmem:[%s1028 + $0x3a] sm:$0xff]
        %v1099 = vld [vmem:[%s1028 + $0x4a] sm:$0xff]
        %v1100 = vld [vmem:[%s1028 + $0x52] sm:$0xff]
        %v1101 = vld [vmem:[%s1028 + $0x62] sm:$0xff]
        %v1102 = vld [vmem:[%s1028 + $0x6a] sm:$0xff]
        %v1103 = vld [vmem:[%s1028 + $0x7a] sm:$0xff]
        %v1104 = vld [vmem:[%s1028 + $0x82] sm:$0xff]
        %v1105 = vld [vmem:[%s1028 + $0x92] sm:$0xff]
        %v1106 = vld [vmem:[%s1028 + $0x9a] sm:$0xff]
        %v1107 = vld [vmem:[%s1028 + $0xaa] sm:$0xff]
        %v1108 = vld [vmem:[%s1028 + $0xb2] sm:$0xff]
        %v1109 = vld [vmem:[%s1028 + $0xc2] sm:$0xff]
        %v1110 = vld [vmem:[%s1028 + $0xca] sm:$0xff]
        %v1111 = vld [vmem:[%s1028 + $0xda] sm:$0xff]
        %v1112 = vld [vmem:[%s1028 + $0xe2] sm:$0xff]
        %v1113 = vld [vmem:[%s1028 + $0xf2] sm:$0xff]
        %v1114 = vld [vmem:[%s1028 + $0xfa] sm:$0xff]
        %v1115 = vld [vmem:[%s1028 + $0x10a] sm:$0xff]
        %v1116 = vld [vmem:[%s1028 + $0x112] sm:$0xff]
        %v1117 = vld [vmem:[%s1028 + $0x122] sm:$0xff]
        %v1118 = vld [vmem:[%s1028 + $0x12a] sm:$0xff]
        %v1119 = vld [vmem:[%s1028 + $0x13a] sm:$0xff]
        %v1120 = vld [vmem:[%s1028 + $0x142] sm:$0xff]
        %v1121 = vld [vmem:[%s1028 + $0x152] sm:$0xff]
        %v1122 = vld [vmem:[%s1028 + $0x15a] sm:$0xff]
        %v1123 = vld [vmem:[%s1028 + $0x16a] sm:$0xff]
        %v1124 = vld [vmem:[%s1028 + $0x172] sm:$0xff]
        %1157 = vrot.lane.b32.xlu0 %v868, 64
        %v1158 = vpop.permute.xlu0 %1157
        %1159 = vrot.lane.b32.xlu0 %v869, 64
        %v1160 = vpop.permute.xlu0 %1159
        %1161 = vrot.lane.b32.xlu0 %v870, 64
        %v1162 = vpop.permute.xlu0 %1161
        %1163 = vrot.lane.b32.xlu0 %v871, 64
        %v1164 = vpop.permute.xlu0 %1163
        %1165 = vrot.lane.b32.xlu0 %v872, 64
        %v1166 = vpop.permute.xlu0 %1165
        %1167 = vrot.lane.b32.xlu0 %v873, 64
        %v1168 = vpop.permute.xlu0 %1167
        %1169 = vrot.lane.b32.xlu0 %v874, 64
        %v1170 = vpop.permute.xlu0 %1169
        %1171 = vrot.lane.b32.xlu0 %v875, 64
        %v1172 = vpop.permute.xlu0 %1171
        %1173 = vrot.lane.b32.xlu0 %v876, 64
        %v1174 = vpop.permute.xlu0 %1173
        %1175 = vrot.lane.b32.xlu0 %v877, 64
        %v1176 = vpop.permute.xlu0 %1175
        %1177 = vrot.lane.b32.xlu0 %v878, 64
        %v1178 = vpop.permute.xlu0 %1177
        %1179 = vrot.lane.b32.xlu0 %v879, 64
        %v1180 = vpop.permute.xlu0 %1179
        %1181 = vrot.lane.b32.xlu0 %v880, 64
        %v1182 = vpop.permute.xlu0 %1181
        %1183 = vrot.lane.b32.xlu0 %v881, 64
        %v1184 = vpop.permute.xlu0 %1183
        %1185 = vrot.lane.b32.xlu0 %v882, 64
        %v1186 = vpop.permute.xlu0 %1185
        %1187 = vrot.lane.b32.xlu0 %v883, 64
        %v1188 = vpop.permute.xlu0 %1187
        %1189 = vrot.lane.b32.xlu0 %v884, 64
        %v1190 = vpop.permute.xlu0 %1189
        %1191 = vrot.lane.b32.xlu0 %v885, 64
        %v1192 = vpop.permute.xlu0 %1191
        %1193 = vrot.lane.b32.xlu0 %v886, 64
        %v1194 = vpop.permute.xlu0 %1193
        %1195 = vrot.lane.b32.xlu0 %v887, 64
        %v1196 = vpop.permute.xlu0 %1195
        %1197 = vrot.lane.b32.xlu0 %v888, 64
        %v1198 = vpop.permute.xlu0 %1197
        %1199 = vrot.lane.b32.xlu0 %v889, 64
        %v1200 = vpop.permute.xlu0 %1199
        %1201 = vrot.lane.b32.xlu0 %v890, 64
        %v1202 = vpop.permute.xlu0 %1201
        %1203 = vrot.lane.b32.xlu0 %v891, 64
        %v1204 = vpop.permute.xlu0 %1203
        %1205 = vrot.lane.b32.xlu0 %v892, 64
        %v1206 = vpop.permute.xlu0 %1205
        %1207 = vrot.lane.b32.xlu0 %v893, 64
        %v1208 = vpop.permute.xlu0 %1207
        %1209 = vrot.lane.b32.xlu0 %v894, 64
        %v1210 = vpop.permute.xlu0 %1209
        %1211 = vrot.lane.b32.xlu0 %v895, 64
        %v1212 = vpop.permute.xlu0 %1211
        %1213 = vrot.lane.b32.xlu0 %v896, 64
        %v1214 = vpop.permute.xlu0 %1213
        %1215 = vrot.lane.b32.xlu0 %v897, 64
        %v1216 = vpop.permute.xlu0 %1215
        %1217 = vrot.lane.b32.xlu0 %v898, 64
        %v1218 = vpop.permute.xlu0 %1217
        %1219 = vrot.lane.b32.xlu0 %v899, 64
        %v1220 = vpop.permute.xlu0 %1219
        %1285 = vrot.lane.b32.xlu0 %v932, 64
        %v1286 = vpop.permute.xlu0 %1285
        %1287 = vrot.lane.b32.xlu0 %v933, 64
        %v1288 = vpop.permute.xlu0 %1287
        %1289 = vrot.lane.b32.xlu0 %v934, 64
        %v1290 = vpop.permute.xlu0 %1289
        %1291 = vrot.lane.b32.xlu0 %v935, 64
        %v1292 = vpop.permute.xlu0 %1291
        %1293 = vrot.lane.b32.xlu0 %v936, 64
        %v1294 = vpop.permute.xlu0 %1293
        %1295 = vrot.lane.b32.xlu0 %v937, 64
        %v1296 = vpop.permute.xlu0 %1295
        %1297 = vrot.lane.b32.xlu0 %v938, 64
        %v1298 = vpop.permute.xlu0 %1297
        %1299 = vrot.lane.b32.xlu0 %v939, 64
        %v1300 = vpop.permute.xlu0 %1299
        %1301 = vrot.lane.b32.xlu0 %v940, 64
        %v1302 = vpop.permute.xlu0 %1301
        %1303 = vrot.lane.b32.xlu0 %v941, 64
        %v1304 = vpop.permute.xlu0 %1303
        %1305 = vrot.lane.b32.xlu0 %v942, 64
        %v1306 = vpop.permute.xlu0 %1305
        %1307 = vrot.lane.b32.xlu0 %v943, 64
        %v1308 = vpop.permute.xlu0 %1307
        %1309 = vrot.lane.b32.xlu0 %v944, 64
        %v1310 = vpop.permute.xlu0 %1309
        %1311 = vrot.lane.b32.xlu0 %v945, 64
        %v1312 = vpop.permute.xlu0 %1311
        %1313 = vrot.lane.b32.xlu0 %v946, 64
        %v1314 = vpop.permute.xlu0 %1313
        %1315 = vrot.lane.b32.xlu0 %v947, 64
        %v1316 = vpop.permute.xlu0 %1315
        %1317 = vrot.lane.b32.xlu0 %v948, 64
        %v1318 = vpop.permute.xlu0 %1317
        %1319 = vrot.lane.b32.xlu0 %v949, 64
        %v1320 = vpop.permute.xlu0 %1319
        %1321 = vrot.lane.b32.xlu0 %v950, 64
        %v1322 = vpop.permute.xlu0 %1321
        %1323 = vrot.lane.b32.xlu0 %v951, 64
        %v1324 = vpop.permute.xlu0 %1323
        %1325 = vrot.lane.b32.xlu0 %v952, 64
        %v1326 = vpop.permute.xlu0 %1325
        %1327 = vrot.lane.b32.xlu0 %v953, 64
        %v1328 = vpop.permute.xlu0 %1327
        %1329 = vrot.lane.b32.xlu0 %v954, 64
        %v1330 = vpop.permute.xlu0 %1329
        %1331 = vrot.lane.b32.xlu0 %v955, 64
        %v1332 = vpop.permute.xlu0 %1331
        %1333 = vrot.lane.b32.xlu0 %v956, 64
        %v1334 = vpop.permute.xlu0 %1333
        %1335 = vrot.lane.b32.xlu0 %v957, 64
        %v1336 = vpop.permute.xlu0 %1335
        %1337 = vrot.lane.b32.xlu0 %v958, 64
        %v1338 = vpop.permute.xlu0 %1337
        %1339 = vrot.lane.b32.xlu0 %v959, 64
        %v1340 = vpop.permute.xlu0 %1339
        %1341 = vrot.lane.b32.xlu0 %v960, 64
        %v1342 = vpop.permute.xlu0 %1341
        %1343 = vrot.lane.b32.xlu0 %v961, 64
        %v1344 = vpop.permute.xlu0 %1343
        %1345 = vrot.lane.b32.xlu0 %v962, 64
        %v1346 = vpop.permute.xlu0 %1345
        %1347 = vrot.lane.b32.xlu0 %v963, 64
        %v1348 = vpop.permute.xlu0 %1347
        %1413 = vrot.lane.b32.xlu0 %v996, 64
        %v1414 = vpop.permute.xlu0 %1413
        %1415 = vrot.lane.b32.xlu0 %v997, 64
        %v1416 = vpop.permute.xlu0 %1415
        %1417 = vrot.lane.b32.xlu0 %v998, 64
        %v1418 = vpop.permute.xlu0 %1417
        %1419 = vrot.lane.b32.xlu0 %v999, 64
        %v1420 = vpop.permute.xlu0 %1419
        %1421 = vrot.lane.b32.xlu0 %v1000, 64
        %v1422 = vpop.permute.xlu0 %1421
        %1423 = vrot.lane.b32.xlu0 %v1001, 64
        %v1424 = vpop.permute.xlu0 %1423
        %1425 = vrot.lane.b32.xlu0 %v1002, 64
        %v1426 = vpop.permute.xlu0 %1425
        %1427 = vrot.lane.b32.xlu0 %v1003, 64
        %v1428 = vpop.permute.xlu0 %1427
        %1429 = vrot.lane.b32.xlu0 %v1004, 64
        %v1430 = vpop.permute.xlu0 %1429
        %1431 = vrot.lane.b32.xlu0 %v1005, 64
        %v1432 = vpop.permute.xlu0 %1431
        %1433 = vrot.lane.b32.xlu0 %v1006, 64
        %v1434 = vpop.permute.xlu0 %1433
        %1435 = vrot.lane.b32.xlu0 %v1007, 64
        %v1436 = vpop.permute.xlu0 %1435
        %1437 = vrot.lane.b32.xlu0 %v1008, 64
        %v1438 = vpop.permute.xlu0 %1437
        %1439 = vrot.lane.b32.xlu0 %v1009, 64
        %v1440 = vpop.permute.xlu0 %1439
        %1441 = vrot.lane.b32.xlu0 %v1010, 64
        %v1442 = vpop.permute.xlu0 %1441
        %1443 = vrot.lane.b32.xlu0 %v1011, 64
        %v1444 = vpop.permute.xlu0 %1443
        %1445 = vrot.lane.b32.xlu0 %v1012, 64
        %v1446 = vpop.permute.xlu0 %1445
        %1447 = vrot.lane.b32.xlu0 %v1013, 64
        %v1448 = vpop.permute.xlu0 %1447
        %1449 = vrot.lane.b32.xlu0 %v1014, 64
        %v1450 = vpop.permute.xlu0 %1449
        %1451 = vrot.lane.b32.xlu0 %v1015, 64
        %v1452 = vpop.permute.xlu0 %1451
        %1453 = vrot.lane.b32.xlu0 %v1016, 64
        %v1454 = vpop.permute.xlu0 %1453
        %1455 = vrot.lane.b32.xlu0 %v1017, 64
        %v1456 = vpop.permute.xlu0 %1455
        %1457 = vrot.lane.b32.xlu0 %v1018, 64
        %v1458 = vpop.permute.xlu0 %1457
        %1459 = vrot.lane.b32.xlu0 %v1019, 64
        %v1460 = vpop.permute.xlu0 %1459
        %1461 = vrot.lane.b32.xlu0 %v1020, 64
        %v1462 = vpop.permute.xlu0 %1461
        %1463 = vrot.lane.b32.xlu0 %v1021, 64
        %v1464 = vpop.permute.xlu0 %1463
        %1465 = vrot.lane.b32.xlu0 %v1022, 64
        %v1466 = vpop.permute.xlu0 %1465
        %1467 = vrot.lane.b32.xlu0 %v1023, 64
        %v1468 = vpop.permute.xlu0 %1467
        %1469 = vrot.lane.b32.xlu0 %v1024, 64
        %v1470 = vpop.permute.xlu0 %1469
        %1471 = vrot.lane.b32.xlu0 %v1025, 64
        %v1472 = vpop.permute.xlu0 %1471
        %1473 = vrot.lane.b32.xlu0 %v1026, 64
        %v1474 = vpop.permute.xlu0 %1473
        %1475 = vrot.lane.b32.xlu0 %v1027, 64
        %v1476 = vpop.permute.xlu0 %1475
        %1541 = vrot.lane.b32.xlu0 %v1061, 64
        %v1542 = vpop.permute.xlu0 %1541
        %1543 = vrot.lane.b32.xlu0 %v1062, 64
        %v1544 = vpop.permute.xlu0 %1543
        %1545 = vrot.lane.b32.xlu0 %v1063, 64
        %v1546 = vpop.permute.xlu0 %1545
        %1547 = vrot.lane.b32.xlu0 %v1064, 64
        %v1548 = vpop.permute.xlu0 %1547
        %1549 = vrot.lane.b32.xlu0 %v1065, 64
        %v1550 = vpop.permute.xlu0 %1549
        %1551 = vrot.lane.b32.xlu0 %v1066, 64
        %v1552 = vpop.permute.xlu0 %1551
        %1553 = vrot.lane.b32.xlu0 %v1067, 64
        %v1554 = vpop.permute.xlu0 %1553
        %1555 = vrot.lane.b32.xlu0 %v1068, 64
        %v1556 = vpop.permute.xlu0 %1555
        %1557 = vrot.lane.b32.xlu0 %v1069, 64
        %v1558 = vpop.permute.xlu0 %1557
        %1559 = vrot.lane.b32.xlu0 %v1070, 64
        %v1560 = vpop.permute.xlu0 %1559
        %1561 = vrot.lane.b32.xlu0 %v1071, 64
        %v1562 = vpop.permute.xlu0 %1561
        %1563 = vrot.lane.b32.xlu0 %v1072, 64
        %v1564 = vpop.permute.xlu0 %1563
        %1565 = vrot.lane.b32.xlu0 %v1073, 64
        %v1566 = vpop.permute.xlu0 %1565
        %1567 = vrot.lane.b32.xlu0 %v1074, 64
        %v1568 = vpop.permute.xlu0 %1567
        %1569 = vrot.lane.b32.xlu0 %v1075, 64
        %v1570 = vpop.permute.xlu0 %1569
        %1571 = vrot.lane.b32.xlu0 %v1076, 64
        %v1572 = vpop.permute.xlu0 %1571
        %1573 = vrot.lane.b32.xlu0 %v1077, 64
        %v1574 = vpop.permute.xlu0 %1573
        %1575 = vrot.lane.b32.xlu0 %v1078, 64
        %v1576 = vpop.permute.xlu0 %1575
        %1577 = vrot.lane.b32.xlu0 %v1079, 64
        %v1578 = vpop.permute.xlu0 %1577
        %1579 = vrot.lane.b32.xlu0 %v1080, 64
        %v1580 = vpop.permute.xlu0 %1579
        %1581 = vrot.lane.b32.xlu0 %v1081, 64
        %v1582 = vpop.permute.xlu0 %1581
        %1583 = vrot.lane.b32.xlu0 %v1082, 64
        %v1584 = vpop.permute.xlu0 %1583
        %1585 = vrot.lane.b32.xlu0 %v1083, 64
        %v1586 = vpop.permute.xlu0 %1585
        %1587 = vrot.lane.b32.xlu0 %v1084, 64
        %v1588 = vpop.permute.xlu0 %1587
        %1589 = vrot.lane.b32.xlu0 %v1085, 64
        %v1590 = vpop.permute.xlu0 %1589
        %1591 = vrot.lane.b32.xlu0 %v1086, 64
        %v1592 = vpop.permute.xlu0 %1591
        %1593 = vrot.lane.b32.xlu0 %v1087, 64
        %v1594 = vpop.permute.xlu0 %1593
        %1595 = vrot.lane.b32.xlu0 %v1088, 64
        %v1596 = vpop.permute.xlu0 %1595
        %1597 = vrot.lane.b32.xlu0 %v1089, 64
        %v1598 = vpop.permute.xlu0 %1597
        %1599 = vrot.lane.b32.xlu0 %v1090, 64
        %v1600 = vpop.permute.xlu0 %1599
        %1601 = vrot.lane.b32.xlu0 %v1091, 64
        %v1602 = vpop.permute.xlu0 %1601
        %1603 = vrot.lane.b32.xlu0 %v1092, 64
        %v1604 = vpop.permute.xlu0 %1603
        %v1637 = vsel %vm747, %v836, %v1158
        %v1638 = vsel %vm747, %v837, %v1160
        %v1639 = vsel %vm747, %v838, %v1162
        %v1640 = vsel %vm747, %v839, %v1164
        %v1641 = vsel %vm747, %v840, %v1166
        %v1642 = vsel %vm747, %v841, %v1168
        %v1643 = vsel %vm747, %v842, %v1170
        %v1644 = vsel %vm747, %v843, %v1172
        %v1645 = vsel %vm747, %v844, %v1174
        %v1646 = vsel %vm747, %v845, %v1176
        %v1647 = vsel %vm747, %v846, %v1178
        %v1648 = vsel %vm747, %v847, %v1180
        %v1649 = vsel %vm747, %v848, %v1182
        %v1650 = vsel %vm747, %v849, %v1184
        %v1651 = vsel %vm747, %v850, %v1186
        %v1652 = vsel %vm747, %v851, %v1188
        %v1653 = vsel %vm747, %v852, %v1190
        %v1654 = vsel %vm747, %v853, %v1192
        %v1655 = vsel %vm747, %v854, %v1194
        %v1656 = vsel %vm747, %v855, %v1196
        %v1657 = vsel %vm747, %v856, %v1198
        %v1658 = vsel %vm747, %v857, %v1200
        %v1659 = vsel %vm747, %v858, %v1202
        %v1660 = vsel %vm747, %v859, %v1204
        %v1661 = vsel %vm747, %v860, %v1206
        %v1662 = vsel %vm747, %v861, %v1208
        %v1663 = vsel %vm747, %v862, %v1210
        %v1664 = vsel %vm747, %v863, %v1212
        %v1665 = vsel %vm747, %v864, %v1214
        %v1666 = vsel %vm747, %v865, %v1216
        %v1667 = vsel %vm747, %v866, %v1218
        %v1668 = vsel %vm747, %v867, %v1220
        %v1669 = vsel %vm747, %v900, %v1286
        %v1670 = vsel %vm747, %v901, %v1288
        %v1671 = vsel %vm747, %v902, %v1290
        %v1672 = vsel %vm747, %v903, %v1292
        %v1673 = vsel %vm747, %v904, %v1294
        %v1674 = vsel %vm747, %v905, %v1296
        %v1675 = vsel %vm747, %v906, %v1298
        %v1676 = vsel %vm747, %v907, %v1300
        %v1677 = vsel %vm747, %v908, %v1302
        %v1678 = vsel %vm747, %v909, %v1304
        %v1679 = vsel %vm747, %v910, %v1306
        %v1680 = vsel %vm747, %v911, %v1308
        %v1681 = vsel %vm747, %v912, %v1310
        %v1682 = vsel %vm747, %v913, %v1312
        %v1683 = vsel %vm747, %v914, %v1314
        %v1684 = vsel %vm747, %v915, %v1316
        %v1685 = vsel %vm747, %v916, %v1318
        %v1686 = vsel %vm747, %v917, %v1320
        %v1687 = vsel %vm747, %v918, %v1322
        %v1688 = vsel %vm747, %v919, %v1324
        %v1689 = vsel %vm747, %v920, %v1326
        %v1690 = vsel %vm747, %v921, %v1328
        %v1691 = vsel %vm747, %v922, %v1330
        %v1692 = vsel %vm747, %v923, %v1332
        %v1693 = vsel %vm747, %v924, %v1334
        %v1694 = vsel %vm747, %v925, %v1336
        %v1695 = vsel %vm747, %v926, %v1338
        %v1696 = vsel %vm747, %v927, %v1340
        %v1697 = vsel %vm747, %v928, %v1342
        %v1698 = vsel %vm747, %v929, %v1344
        %v1699 = vsel %vm747, %v930, %v1346
        %v1700 = vsel %vm747, %v931, %v1348
        %v1701 = vsel %vm747, %v964, %v1414
        %v1702 = vsel %vm747, %v965, %v1416
        %v1703 = vsel %vm747, %v966, %v1418
        %v1704 = vsel %vm747, %v967, %v1420
        %v1705 = vsel %vm747, %v968, %v1422
        %v1706 = vsel %vm747, %v969, %v1424
        %v1707 = vsel %vm747, %v970, %v1426
        %v1708 = vsel %vm747, %v971, %v1428
        %v1709 = vsel %vm747, %v972, %v1430
        %v1710 = vsel %vm747, %v973, %v1432
        %v1711 = vsel %vm747, %v974, %v1434
        %v1712 = vsel %vm747, %v975, %v1436
        %v1713 = vsel %vm747, %v976, %v1438
        %v1714 = vsel %vm747, %v977, %v1440
        %v1715 = vsel %vm747, %v978, %v1442
        %v1716 = vsel %vm747, %v979, %v1444
        %v1717 = vsel %vm747, %v980, %v1446
        %v1718 = vsel %vm747, %v981, %v1448
        %v1719 = vsel %vm747, %v982, %v1450
        %v1720 = vsel %vm747, %v983, %v1452
        %v1721 = vsel %vm747, %v984, %v1454
        %v1722 = vsel %vm747, %v985, %v1456
        %v1723 = vsel %vm747, %v986, %v1458
        %v1724 = vsel %vm747, %v987, %v1460
        %v1725 = vsel %vm747, %v988, %v1462
        %v1726 = vsel %vm747, %v989, %v1464
        %v1727 = vsel %vm747, %v990, %v1466
        %v1728 = vsel %vm747, %v991, %v1468
        %v1729 = vsel %vm747, %v992, %v1470
        %v1730 = vsel %vm747, %v993, %v1472
        %v1731 = vsel %vm747, %v994, %v1474
        %v1732 = vsel %vm747, %v995, %v1476
        %v1733 = vsel %vm747, %v1029, %v1542
        %v1734 = vsel %vm747, %v1030, %v1544
        %v1735 = vsel %vm747, %v1031, %v1546
        %v1736 = vsel %vm747, %v1032, %v1548
        %v1737 = vsel %vm747, %v1033, %v1550
        %v1738 = vsel %vm747, %v1034, %v1552
        %v1739 = vsel %vm747, %v1035, %v1554
        %v1740 = vsel %vm747, %v1036, %v1556
        %v1741 = vsel %vm747, %v1037, %v1558
        %v1742 = vsel %vm747, %v1038, %v1560
        %v1743 = vsel %vm747, %v1039, %v1562
        %v1744 = vsel %vm747, %v1040, %v1564
        %v1745 = vsel %vm747, %v1041, %v1566
        %v1746 = vsel %vm747, %v1042, %v1568
        %v1747 = vsel %vm747, %v1043, %v1570
        %v1748 = vsel %vm747, %v1044, %v1572
        %v1749 = vsel %vm747, %v1045, %v1574
        %v1750 = vsel %vm747, %v1046, %v1576
        %v1751 = vsel %vm747, %v1047, %v1578
        %v1752 = vsel %vm747, %v1048, %v1580
        %v1753 = vsel %vm747, %v1049, %v1582
        %v1754 = vsel %vm747, %v1050, %v1584
        %v1755 = vsel %vm747, %v1051, %v1586
        %v1756 = vsel %vm747, %v1052, %v1588
        %v1757 = vsel %vm747, %v1053, %v1590
        %v1758 = vsel %vm747, %v1054, %v1592
        %v1759 = vsel %vm747, %v1055, %v1594
        %v1760 = vsel %vm747, %v1056, %v1596
        %v1761 = vsel %vm747, %v1057, %v1598
        %v1762 = vsel %vm747, %v1058, %v1600
        %v1763 = vsel %vm747, %v1059, %v1602
        %v1764 = vsel %vm747, %v1060, %v1604
        %v1765 = vld [vmem:[%s3] sm:$0xff]
        %v1766 = vld [vmem:[%s3 + $0x8] sm:$0xff]
        %v1767 = vld [vmem:[%s3 + $0x10] sm:$0xff]
        %v1768 = vld [vmem:[%s3 + $0x18] sm:$0xff]
        %v1769 = vld [vmem:[%s3 + $0x20] sm:$0xff]
        %v1770 = vld [vmem:[%s3 + $0x28] sm:$0xff]
        %v1771 = vld [vmem:[%s3 + $0x30] sm:$0xff]
        %v1772 = vld [vmem:[%s3 + $0x38] sm:$0xff]
        %v1773 = vld [vmem:[%s3 + $0x40] sm:$0xff]
        %v1774 = vld [vmem:[%s3 + $0x48] sm:$0xff]
        %v1775 = vld [vmem:[%s3 + $0x50] sm:$0xff]
        %v1776 = vld [vmem:[%s3 + $0x58] sm:$0xff]
        %v1777 = vld [vmem:[%s3 + $0x60] sm:$0xff]
        %v1778 = vld [vmem:[%s3 + $0x68] sm:$0xff]
        %v1779 = vld [vmem:[%s3 + $0x70] sm:$0xff]
        %v1780 = vld [vmem:[%s3 + $0x78] sm:$0xff]
        %v1781 = vld [vmem:[%s3 + $0x80] sm:$0xff]
        %v1782 = vld [vmem:[%s3 + $0x88] sm:$0xff]
        %v1783 = vld [vmem:[%s3 + $0x90] sm:$0xff]
        %v1784 = vld [vmem:[%s3 + $0x98] sm:$0xff]
        %v1785 = vld [vmem:[%s3 + $0xa0] sm:$0xff]
        %v1786 = vld [vmem:[%s3 + $0xa8] sm:$0xff]
        %v1787 = vld [vmem:[%s3 + $0xb0] sm:$0xff]
        %v1788 = vld [vmem:[%s3 + $0xb8] sm:$0xff]
        %v1789 = vld [vmem:[%s3 + $0xc0] sm:$0xff]
        %v1790 = vld [vmem:[%s3 + $0xc8] sm:$0xff]
        %v1791 = vld [vmem:[%s3 + $0xd0] sm:$0xff]
        %v1792 = vld [vmem:[%s3 + $0xd8] sm:$0xff]
        %v1793 = vld [vmem:[%s3 + $0xe0] sm:$0xff]
        %v1794 = vld [vmem:[%s3 + $0xe8] sm:$0xff]
        %v1795 = vld [vmem:[%s3 + $0xf0] sm:$0xff]
        %v1796 = vld [vmem:[%s3 + $0xf8] sm:$0xff]
        %v1797 = vld [vmem:[%s3 + $0x100] sm:$0xff]
        %v1798 = vld [vmem:[%s3 + $0x108] sm:$0xff]
        %v1799 = vld [vmem:[%s3 + $0x110] sm:$0xff]
        %v1800 = vld [vmem:[%s3 + $0x118] sm:$0xff]
        %v1801 = vld [vmem:[%s3 + $0x120] sm:$0xff]
        %v1802 = vld [vmem:[%s3 + $0x128] sm:$0xff]
        %v1803 = vld [vmem:[%s3 + $0x130] sm:$0xff]
        %v1804 = vld [vmem:[%s3 + $0x138] sm:$0xff]
        %v1805 = vld [vmem:[%s3 + $0x140] sm:$0xff]
        %v1806 = vld [vmem:[%s3 + $0x148] sm:$0xff]
        %v1807 = vld [vmem:[%s3 + $0x150] sm:$0xff]
        %v1808 = vld [vmem:[%s3 + $0x158] sm:$0xff]
        %v1809 = vld [vmem:[%s3 + $0x160] sm:$0xff]
        %v1810 = vld [vmem:[%s3 + $0x168] sm:$0xff]
        %v1811 = vld [vmem:[%s3 + $0x170] sm:$0xff]
        %v1812 = vld [vmem:[%s3 + $0x178] sm:$0xff]
        %v1813 = vld [vmem:[%s3 + $0x180] sm:$0xff]
        %v1814 = vld [vmem:[%s3 + $0x188] sm:$0xff]
        %v1815 = vld [vmem:[%s3 + $0x190] sm:$0xff]
        %v1816 = vld [vmem:[%s3 + $0x198] sm:$0xff]
        %v1817 = vld [vmem:[%s3 + $0x1a0] sm:$0xff]
        %v1818 = vld [vmem:[%s3 + $0x1a8] sm:$0xff]
        %v1819 = vld [vmem:[%s3 + $0x1b0] sm:$0xff]
        %v1820 = vld [vmem:[%s3 + $0x1b8] sm:$0xff]
        %v1821 = vld [vmem:[%s3 + $0x1c0] sm:$0xff]
        %v1822 = vld [vmem:[%s3 + $0x1c8] sm:$0xff]
        %v1823 = vld [vmem:[%s3 + $0x1d0] sm:$0xff]
        %v1824 = vld [vmem:[%s3 + $0x1d8] sm:$0xff]
        %v1825 = vld [vmem:[%s3 + $0x1e0] sm:$0xff]
        %v1826 = vld [vmem:[%s3 + $0x1e8] sm:$0xff]
        %v1827 = vld [vmem:[%s3 + $0x1f0] sm:$0xff]
        %v1828 = vld [vmem:[%s3 + $0x1f8] sm:$0xff]
        %v1829 = vld [vmem:[%s3 + $0x200] sm:$0xff]
        %v1830 = vld [vmem:[%s3 + $0x208] sm:$0xff]
        %v1831 = vld [vmem:[%s3 + $0x210] sm:$0xff]
        %v1832 = vld [vmem:[%s3 + $0x218] sm:$0xff]
        %v1833 = vld [vmem:[%s3 + $0x220] sm:$0xff]
        %v1834 = vld [vmem:[%s3 + $0x228] sm:$0xff]
        %v1835 = vld [vmem:[%s3 + $0x230] sm:$0xff]
        %v1836 = vld [vmem:[%s3 + $0x238] sm:$0xff]
        %v1837 = vld [vmem:[%s4] sm:$0x1]
        %v1839 = vlaneseq
        %v1840 = vshrl.u32 %v1839, 7
        %v1841 = vsub.s32 0, %v1840
        %v1842 = vrot.slane %v1837, %v1841
        %v1845 = vsel %vm747, %v1093, 0
        %v1848 = vsel %vm747, %v1094, 0
        %v1851 = vsel %vm747, %v1095, 0
        %v1854 = vsel %vm747, %v1096, 0
        %v1857 = vsel %vm747, %v1097, 0
        %v1860 = vsel %vm747, %v1098, 0
        %v1863 = vsel %vm747, %v1099, 0
        %v1866 = vsel %vm747, %v1100, 0
        %v1869 = vsel %vm747, %v1101, 0
        %v1872 = vsel %vm747, %v1102, 0
        %v1875 = vsel %vm747, %v1103, 0
        %v1878 = vsel %vm747, %v1104, 0
        %v1881 = vsel %vm747, %v1105, 0
        %v1884 = vsel %vm747, %v1106, 0
        %v1887 = vsel %vm747, %v1107, 0
        %v1890 = vsel %vm747, %v1108, 0
        %v1893 = vsel %vm747, %v1109, 0
        %v1896 = vsel %vm747, %v1110, 0
        %v1899 = vsel %vm747, %v1111, 0
        %v1902 = vsel %vm747, %v1112, 0
        %v1905 = vsel %vm747, %v1113, 0
        %v1908 = vsel %vm747, %v1114, 0
        %v1911 = vsel %vm747, %v1115, 0
        %v1914 = vsel %vm747, %v1116, 0
        %v1917 = vsel %vm747, %v1117, 0
        %v1920 = vsel %vm747, %v1118, 0
        %v1923 = vsel %vm747, %v1119, 0
        %v1926 = vsel %vm747, %v1120, 0
        %v1929 = vsel %vm747, %v1121, 0
        %v1932 = vsel %vm747, %v1122, 0
        %v1935 = vsel %vm747, %v1123, 0
        %v1938 = vsel %vm747, %v1124, 0
        %1940 = vmatprep.subr.mxu0 0.0
        %1941 = vmatpush1.msra.mxu0 %v1780
        %1942 = vmatprep.subr.mxu0 0.0
        %1943 = vmatpush1.msra.mxu0 %v1779
        %1944 = vmatprep.subr.mxu0 0.0
        %1945 = vmatpush1.msra.mxu0 %v1778
        %1946 = vmatprep.subr.mxu0 0.0
        %1947 = vmatpush1.msra.mxu0 %v1777
        %1948 = vmatprep.subr.mxu0 0.0
        %1949 = vmatpush1.msra.mxu0 %v1776
        %1950 = vmatprep.subr.mxu0 0.0
        %1951 = vmatpush1.msra.mxu0 %v1775
        %1952 = vmatprep.subr.mxu0 0.0
        %1953 = vmatpush1.msra.mxu0 %v1774
        %1954 = vmatprep.subr.mxu0 0.0
        %1955 = vmatpush1.msra.mxu0 %v1773
        %1956 = vmatprep.subr.mxu0 0.0
        %1957 = vmatpush1.msra.mxu0 %v1772
        %1958 = vmatprep.subr.mxu0 0.0
        %1959 = vmatpush1.msra.mxu0 %v1771
        %1960 = vmatprep.subr.mxu0 0.0
        %1961 = vmatpush1.msra.mxu0 %v1770
        %1962 = vmatprep.subr.mxu0 0.0
        %1963 = vmatpush1.msra.mxu0 %v1769
        %1964 = vmatprep.subr.mxu0 0.0
        %1965 = vmatpush1.msra.mxu0 %v1768
        %1966 = vmatprep.subr.mxu0 0.0
        %1967 = vmatpush1.msra.mxu0 %v1767
        %1968 = vmatprep.subr.mxu0 0.0
        %1969 = vmatpush1.msra.mxu0 %v1766
        %1970 = vmatprep.subr.mxu0 0.0
        %1971 = vmatpush1.msra.mxu0 %v1765
        %1972 = vmatprep.subr.mxu0 0.0
        %1973 = vmatpush2.msra.mxu0 %v1796
        %1974 = vmatprep.subr.mxu0 0.0
        %1975 = vmatpush2.msra.mxu0 %v1795
        %1976 = vmatprep.subr.mxu0 0.0
        %1977 = vmatpush2.msra.mxu0 %v1794
        %1978 = vmatprep.subr.mxu0 0.0
        %1979 = vmatpush2.msra.mxu0 %v1793
        %1980 = vmatprep.subr.mxu0 0.0
        %1981 = vmatpush2.msra.mxu0 %v1792
        %1982 = vmatprep.subr.mxu0 0.0
        %1983 = vmatpush2.msra.mxu0 %v1791
        %1984 = vmatprep.subr.mxu0 0.0
        %1985 = vmatpush2.msra.mxu0 %v1790
        %1986 = vmatprep.subr.mxu0 0.0
        %1987 = vmatpush2.msra.mxu0 %v1789
        %1988 = vmatprep.subr.mxu0 0.0
        %1989 = vmatpush2.msra.mxu0 %v1788
        %1990 = vmatprep.subr.mxu0 0.0
        %1991 = vmatpush2.msra.mxu0 %v1787
        %1992 = vmatprep.subr.mxu0 0.0
        %1993 = vmatpush2.msra.mxu0 %v1786
        %1994 = vmatprep.subr.mxu0 0.0
        %1995 = vmatpush2.msra.mxu0 %v1785
        %1996 = vmatprep.subr.mxu0 0.0
        %1997 = vmatpush2.msra.mxu0 %v1784
        %1998 = vmatprep.subr.mxu0 0.0
        %1999 = vmatpush2.msra.mxu0 %v1783
        %2000 = vmatprep.subr.mxu0 0.0
        %2001 = vmatpush2.msra.mxu0 %v1782
        %2002 = vmatprep.subr.mxu0 0.0
        %2003 = vmatpush2.msra.mxu0 %v1781
        %2004 = vmatprep.mubr.f32.mxu0 %v1669
        %2005 = vmatmul.mubr.f32.gmra.mxu0 %v1637
        %v2006 = vpop.f32.mrf.mxu0
        %v2007 = vadd.f32 %v1842, %v2006
        %v2008 = vpop.f32.mrf.mxu0
        %2009 = vmatprep.mubr.f32.mxu0 %v1670
        %2010 = vmatmul.mubr.f32.gmra.mxu0 %v1638
        %v2011 = vpop.f32.mrf.mxu0
        %v2012 = vadd.f32 %v1842, %v2011
        %v2013 = vpop.f32.mrf.mxu0
        %2014 = vmatprep.mubr.f32.mxu0 %v1671
        %2015 = vmatmul.mubr.f32.gmra.mxu0 %v1639
        %v2016 = vpop.f32.mrf.mxu0
        %v2017 = vadd.f32 %v1842, %v2016
        %v2018 = vpop.f32.mrf.mxu0
        %2019 = vmatprep.mubr.f32.mxu0 %v1672
        %2020 = vmatmul.mubr.f32.gmra.mxu0 %v1640
        %v2021 = vpop.f32.mrf.mxu0
        %v2022 = vadd.f32 %v1842, %v2021
        %v2023 = vpop.f32.mrf.mxu0
        %2024 = vmatprep.mubr.f32.mxu0 %v1673
        %2025 = vmatmul.mubr.f32.gmra.mxu0 %v1641
        %v2026 = vpop.f32.mrf.mxu0
        %v2027 = vadd.f32 %v1842, %v2026
        %v2028 = vpop.f32.mrf.mxu0
        %2029 = vmatprep.mubr.f32.mxu0 %v1674
        %2030 = vmatmul.mubr.f32.gmra.mxu0 %v1642
        %v2031 = vpop.f32.mrf.mxu0
        %v2032 = vadd.f32 %v1842, %v2031
        %v2033 = vpop.f32.mrf.mxu0
        %2034 = vmatprep.mubr.f32.mxu0 %v1675
        %2035 = vmatmul.mubr.f32.gmra.mxu0 %v1643
        %v2036 = vpop.f32.mrf.mxu0
        %v2037 = vadd.f32 %v1842, %v2036
        %v2038 = vpop.f32.mrf.mxu0
        %2039 = vmatprep.mubr.f32.mxu0 %v1676
        %2040 = vmatmul.mubr.f32.gmra.mxu0 %v1644
        %v2041 = vpop.f32.mrf.mxu0
        %v2042 = vadd.f32 %v1842, %v2041
        %v2043 = vpop.f32.mrf.mxu0
        %2044 = vmatprep.mubr.f32.mxu0 %v1677
        %2045 = vmatmul.mubr.f32.gmra.mxu0 %v1645
        %v2046 = vpop.f32.mrf.mxu0
        %v2047 = vadd.f32 %v1842, %v2046
        %v2048 = vpop.f32.mrf.mxu0
        %2049 = vmatprep.mubr.f32.mxu0 %v1678
        %2050 = vmatmul.mubr.f32.gmra.mxu0 %v1646
        %v2051 = vpop.f32.mrf.mxu0
        %v2052 = vadd.f32 %v1842, %v2051
        %v2053 = vpop.f32.mrf.mxu0
        %2054 = vmatprep.mubr.f32.mxu0 %v1679
        %2055 = vmatmul.mubr.f32.gmra.mxu0 %v1647
        %v2056 = vpop.f32.mrf.mxu0
        %v2057 = vadd.f32 %v1842, %v2056
        %v2058 = vpop.f32.mrf.mxu0
        %2059 = vmatprep.mubr.f32.mxu0 %v1680
        %2060 = vmatmul.mubr.f32.gmra.mxu0 %v1648
        %v2061 = vpop.f32.mrf.mxu0
        %v2062 = vadd.f32 %v1842, %v2061
        %v2063 = vpop.f32.mrf.mxu0
        %2064 = vmatprep.mubr.f32.mxu0 %v1681
        %2065 = vmatmul.mubr.f32.gmra.mxu0 %v1649
        %v2066 = vpop.f32.mrf.mxu0
        %v2067 = vadd.f32 %v1842, %v2066
        %v2068 = vpop.f32.mrf.mxu0
        %2069 = vmatprep.mubr.f32.mxu0 %v1682
        %2070 = vmatmul.mubr.f32.gmra.mxu0 %v1650
        %v2071 = vpop.f32.mrf.mxu0
        %v2072 = vadd.f32 %v1842, %v2071
        %v2073 = vpop.f32.mrf.mxu0
        %2074 = vmatprep.mubr.f32.mxu0 %v1683
        %2075 = vmatmul.mubr.f32.gmra.mxu0 %v1651
        %v2076 = vpop.f32.mrf.mxu0
        %v2077 = vadd.f32 %v1842, %v2076
        %v2078 = vpop.f32.mrf.mxu0
        %2079 = vmatprep.mubr.f32.mxu0 %v1684
        %2080 = vmatmul.mubr.f32.gmra.mxu0 %v1652
        %v2081 = vpop.f32.mrf.mxu0
        %v2082 = vadd.f32 %v1842, %v2081
        %v2083 = vpop.f32.mrf.mxu0
        %2084 = vmatprep.mubr.f32.mxu0 %v1685
        %2085 = vmatmul.mubr.f32.gmra.mxu0 %v1653
        %v2086 = vpop.f32.mrf.mxu0
        %v2087 = vadd.f32 %v1842, %v2086
        %v2088 = vpop.f32.mrf.mxu0
        %2089 = vmatprep.mubr.f32.mxu0 %v1686
        %2090 = vmatmul.mubr.f32.gmra.mxu0 %v1654
        %v2091 = vpop.f32.mrf.mxu0
        %v2092 = vadd.f32 %v1842, %v2091
        %v2093 = vpop.f32.mrf.mxu0
        %2094 = vmatprep.mubr.f32.mxu0 %v1687
        %2095 = vmatmul.mubr.f32.gmra.mxu0 %v1655
        %v2096 = vpop.f32.mrf.mxu0
        %v2097 = vadd.f32 %v1842, %v2096
        %v2098 = vpop.f32.mrf.mxu0
        %2099 = vmatprep.mubr.f32.mxu0 %v1688
        %2100 = vmatmul.mubr.f32.gmra.mxu0 %v1656
        %v2101 = vpop.f32.mrf.mxu0
        %v2102 = vadd.f32 %v1842, %v2101
        %v2103 = vpop.f32.mrf.mxu0
        %2104 = vmatprep.mubr.f32.mxu0 %v1689
        %2105 = vmatmul.mubr.f32.gmra.mxu0 %v1657
        %v2106 = vpop.f32.mrf.mxu0
        %v2107 = vadd.f32 %v1842, %v2106
        %v2108 = vpop.f32.mrf.mxu0
        %2109 = vmatprep.mubr.f32.mxu0 %v1690
        %2110 = vmatmul.mubr.f32.gmra.mxu0 %v1658
        %v2111 = vpop.f32.mrf.mxu0
        %v2112 = vadd.f32 %v1842, %v2111
        %v2113 = vpop.f32.mrf.mxu0
        %2114 = vmatprep.mubr.f32.mxu0 %v1691
        %2115 = vmatmul.mubr.f32.gmra.mxu0 %v1659
        %v2116 = vpop.f32.mrf.mxu0
        %v2117 = vadd.f32 %v1842, %v2116
        %v2118 = vpop.f32.mrf.mxu0
        %2119 = vmatprep.mubr.f32.mxu0 %v1692
        %2120 = vmatmul.mubr.f32.gmra.mxu0 %v1660
        %v2121 = vpop.f32.mrf.mxu0
        %v2122 = vadd.f32 %v1842, %v2121
        %v2123 = vpop.f32.mrf.mxu0
        %2124 = vmatprep.mubr.f32.mxu0 %v1693
        %2125 = vmatmul.mubr.f32.gmra.mxu0 %v1661
        %v2126 = vpop.f32.mrf.mxu0
        %v2127 = vadd.f32 %v1842, %v2126
        %v2128 = vpop.f32.mrf.mxu0
        %2129 = vmatprep.mubr.f32.mxu0 %v1694
        %2130 = vmatmul.mubr.f32.gmra.mxu0 %v1662
        %v2131 = vpop.f32.mrf.mxu0
        %v2132 = vadd.f32 %v1842, %v2131
        %v2133 = vpop.f32.mrf.mxu0
        %2134 = vmatprep.mubr.f32.mxu0 %v1695
        %2135 = vmatmul.mubr.f32.gmra.mxu0 %v1663
        %v2136 = vpop.f32.mrf.mxu0
        %v2137 = vadd.f32 %v1842, %v2136
        %v2138 = vpop.f32.mrf.mxu0
        %2139 = vmatprep.mubr.f32.mxu0 %v1696
        %2140 = vmatmul.mubr.f32.gmra.mxu0 %v1664
        %v2141 = vpop.f32.mrf.mxu0
        %v2142 = vadd.f32 %v1842, %v2141
        %v2143 = vpop.f32.mrf.mxu0
        %2144 = vmatprep.mubr.f32.mxu0 %v1697
        %2145 = vmatmul.mubr.f32.gmra.mxu0 %v1665
        %v2146 = vpop.f32.mrf.mxu0
        %v2147 = vadd.f32 %v1842, %v2146
        %v2148 = vpop.f32.mrf.mxu0
        %2149 = vmatprep.mubr.f32.mxu0 %v1698
        %2150 = vmatmul.mubr.f32.gmra.mxu0 %v1666
        %v2151 = vpop.f32.mrf.mxu0
        %v2152 = vadd.f32 %v1842, %v2151
        %v2153 = vpop.f32.mrf.mxu0
        %2154 = vmatprep.mubr.f32.mxu0 %v1699
        %2155 = vmatmul.mubr.f32.gmra.mxu0 %v1667
        %v2156 = vpop.f32.mrf.mxu0
        %v2157 = vadd.f32 %v1842, %v2156
        %v2158 = vpop.f32.mrf.mxu0
        %2159 = vmatprep.mubr.f32.mxu0 %v1700
        %2160 = vmatmul.mubr.f32.gmra.mxu0 %v1668
        %v2161 = vpop.f32.mrf.mxu0
        %v2162 = vadd.f32 %v1842, %v2161
        %v2163 = vpop.f32.mrf.mxu0
        %2164 = vdwg.mxu0
        %2165 = vmatprep.subr.mxu0 0.0
        %2166 = vmatpush1.msra.mxu0 %v1812
        %2167 = vmatprep.subr.mxu0 0.0
        %2168 = vmatpush1.msra.mxu0 %v1811
        %2169 = vmatprep.subr.mxu0 0.0
        %2170 = vmatpush1.msra.mxu0 %v1810
        %2171 = vmatprep.subr.mxu0 0.0
        %2172 = vmatpush1.msra.mxu0 %v1809
        %2173 = vmatprep.subr.mxu0 0.0
        %2174 = vmatpush1.msra.mxu0 %v1808
        %2175 = vmatprep.subr.mxu0 0.0
        %2176 = vmatpush1.msra.mxu0 %v1807
        %2177 = vmatprep.subr.mxu0 0.0
        %2178 = vmatpush1.msra.mxu0 %v1806
        %2179 = vmatprep.subr.mxu0 0.0
        %2180 = vmatpush1.msra.mxu0 %v1805
        %2181 = vmatprep.subr.mxu0 0.0
        %2182 = vmatpush1.msra.mxu0 %v1804
        %2183 = vmatprep.subr.mxu0 0.0
        %2184 = vmatpush1.msra.mxu0 %v1803
        %2185 = vmatprep.subr.mxu0 0.0
        %2186 = vmatpush1.msra.mxu0 %v1802
        %2187 = vmatprep.subr.mxu0 0.0
        %2188 = vmatpush1.msra.mxu0 %v1801
        %2189 = vmatprep.subr.mxu0 0.0
        %2190 = vmatpush1.msra.mxu0 %v1800
        %2191 = vmatprep.subr.mxu0 0.0
        %2192 = vmatpush1.msra.mxu0 %v1799
        %2193 = vmatprep.subr.mxu0 0.0
        %2194 = vmatpush1.msra.mxu0 %v1798
        %2195 = vmatprep.subr.mxu0 0.0
        %2196 = vmatpush1.msra.mxu0 %v1797
        %2197 = vmatprep.subr.mxu0 0.0
        %2198 = vmatpush2.msra.mxu0 %v1828
        %2199 = vmatprep.subr.mxu0 0.0
        %2200 = vmatpush2.msra.mxu0 %v1827
        %2201 = vmatprep.subr.mxu0 0.0
        %2202 = vmatpush2.msra.mxu0 %v1826
        %2203 = vmatprep.subr.mxu0 0.0
        %2204 = vmatpush2.msra.mxu0 %v1825
        %2205 = vmatprep.subr.mxu0 0.0
        %2206 = vmatpush2.msra.mxu0 %v1824
        %2207 = vmatprep.subr.mxu0 0.0
        %2208 = vmatpush2.msra.mxu0 %v1823
        %2209 = vmatprep.subr.mxu0 0.0
        %2210 = vmatpush2.msra.mxu0 %v1822
        %2211 = vmatprep.subr.mxu0 0.0
        %2212 = vmatpush2.msra.mxu0 %v1821
        %2213 = vmatprep.subr.mxu0 0.0
        %2214 = vmatpush2.msra.mxu0 %v1820
        %2215 = vmatprep.subr.mxu0 0.0
        %2216 = vmatpush2.msra.mxu0 %v1819
        %2217 = vmatprep.subr.mxu0 0.0
        %2218 = vmatpush2.msra.mxu0 %v1818
        %2219 = vmatprep.subr.mxu0 0.0
        %2220 = vmatpush2.msra.mxu0 %v1817
        %2221 = vmatprep.subr.mxu0 0.0
        %2222 = vmatpush2.msra.mxu0 %v1816
        %2223 = vmatprep.subr.mxu0 0.0
        %2224 = vmatpush2.msra.mxu0 %v1815
        %2225 = vmatprep.subr.mxu0 0.0
        %2226 = vmatpush2.msra.mxu0 %v1814
        %2227 = vmatprep.subr.mxu0 0.0
        %2228 = vmatpush2.msra.mxu0 %v1813
        %2229 = vmatprep.mubr.f32.mxu0 %v1733
        %2230 = vmatmul.mubr.f32.gmra.mxu0 %v1701
        %v2231 = vpop.f32.mrf.mxu0
        %v2232 = vadd.f32 %v2007, %v2231
        %v2233 = vpop.f32.mrf.mxu0
        %2234 = vmatprep.mubr.f32.mxu0 %v1734
        %2235 = vmatmul.mubr.f32.gmra.mxu0 %v1702
        %v2236 = vpop.f32.mrf.mxu0
        %v2237 = vadd.f32 %v2012, %v2236
        %v2238 = vpop.f32.mrf.mxu0
        %2239 = vmatprep.mubr.f32.mxu0 %v1735
        %2240 = vmatmul.mubr.f32.gmra.mxu0 %v1703
        %v2241 = vpop.f32.mrf.mxu0
        %v2242 = vadd.f32 %v2017, %v2241
        %v2243 = vpop.f32.mrf.mxu0
        %2244 = vmatprep.mubr.f32.mxu0 %v1736
        %2245 = vmatmul.mubr.f32.gmra.mxu0 %v1704
        %v2246 = vpop.f32.mrf.mxu0
        %v2247 = vadd.f32 %v2022, %v2246
        %v2248 = vpop.f32.mrf.mxu0
        %2249 = vmatprep.mubr.f32.mxu0 %v1737
        %2250 = vmatmul.mubr.f32.gmra.mxu0 %v1705
        %v2251 = vpop.f32.mrf.mxu0
        %v2252 = vadd.f32 %v2027, %v2251
        %v2253 = vpop.f32.mrf.mxu0
        %2254 = vmatprep.mubr.f32.mxu0 %v1738
        %2255 = vmatmul.mubr.f32.gmra.mxu0 %v1706
        %v2256 = vpop.f32.mrf.mxu0
        %v2257 = vadd.f32 %v2032, %v2256
        %v2258 = vpop.f32.mrf.mxu0
        %2259 = vmatprep.mubr.f32.mxu0 %v1739
        %2260 = vmatmul.mubr.f32.gmra.mxu0 %v1707
        %v2261 = vpop.f32.mrf.mxu0
        %v2262 = vadd.f32 %v2037, %v2261
        %v2263 = vpop.f32.mrf.mxu0
        %2264 = vmatprep.mubr.f32.mxu0 %v1740
        %2265 = vmatmul.mubr.f32.gmra.mxu0 %v1708
        %v2266 = vpop.f32.mrf.mxu0
        %v2267 = vadd.f32 %v2042, %v2266
        %v2268 = vpop.f32.mrf.mxu0
        %2269 = vmatprep.mubr.f32.mxu0 %v1741
        %2270 = vmatmul.mubr.f32.gmra.mxu0 %v1709
        %v2271 = vpop.f32.mrf.mxu0
        %v2272 = vadd.f32 %v2047, %v2271
        %v2273 = vpop.f32.mrf.mxu0
        %2274 = vmatprep.mubr.f32.mxu0 %v1742
        %2275 = vmatmul.mubr.f32.gmra.mxu0 %v1710
        %v2276 = vpop.f32.mrf.mxu0
        %v2277 = vadd.f32 %v2052, %v2276
        %v2278 = vpop.f32.mrf.mxu0
        %2279 = vmatprep.mubr.f32.mxu0 %v1743
        %2280 = vmatmul.mubr.f32.gmra.mxu0 %v1711
        %v2281 = vpop.f32.mrf.mxu0
        %v2282 = vadd.f32 %v2057, %v2281
        %v2283 = vpop.f32.mrf.mxu0
        %2284 = vmatprep.mubr.f32.mxu0 %v1744
        %2285 = vmatmul.mubr.f32.gmra.mxu0 %v1712
        %v2286 = vpop.f32.mrf.mxu0
        %v2287 = vadd.f32 %v2062, %v2286
        %v2288 = vpop.f32.mrf.mxu0
        %2289 = vmatprep.mubr.f32.mxu0 %v1745
        %2290 = vmatmul.mubr.f32.gmra.mxu0 %v1713
        %v2291 = vpop.f32.mrf.mxu0
        %v2292 = vadd.f32 %v2067, %v2291
        %v2293 = vpop.f32.mrf.mxu0
        %2294 = vmatprep.mubr.f32.mxu0 %v1746
        %2295 = vmatmul.mubr.f32.gmra.mxu0 %v1714
        %v2296 = vpop.f32.mrf.mxu0
        %v2297 = vadd.f32 %v2072, %v2296
        %v2298 = vpop.f32.mrf.mxu0
        %2299 = vmatprep.mubr.f32.mxu0 %v1747
        %2300 = vmatmul.mubr.f32.gmra.mxu0 %v1715
        %v2301 = vpop.f32.mrf.mxu0
        %v2302 = vadd.f32 %v2077, %v2301
        %v2303 = vpop.f32.mrf.mxu0
        %2304 = vmatprep.mubr.f32.mxu0 %v1748
        %2305 = vmatmul.mubr.f32.gmra.mxu0 %v1716
        %v2306 = vpop.f32.mrf.mxu0
        %v2307 = vadd.f32 %v2082, %v2306
        %v2308 = vpop.f32.mrf.mxu0
        %2309 = vmatprep.mubr.f32.mxu0 %v1749
        %2310 = vmatmul.mubr.f32.gmra.mxu0 %v1717
        %v2311 = vpop.f32.mrf.mxu0
        %v2312 = vadd.f32 %v2087, %v2311
        %v2313 = vpop.f32.mrf.mxu0
        %2314 = vmatprep.mubr.f32.mxu0 %v1750
        %2315 = vmatmul.mubr.f32.gmra.mxu0 %v1718
        %v2316 = vpop.f32.mrf.mxu0
        %v2317 = vadd.f32 %v2092, %v2316
        %v2318 = vpop.f32.mrf.mxu0
        %2319 = vmatprep.mubr.f32.mxu0 %v1751
        %2320 = vmatmul.mubr.f32.gmra.mxu0 %v1719
        %v2321 = vpop.f32.mrf.mxu0
        %v2322 = vadd.f32 %v2097, %v2321
        %v2323 = vpop.f32.mrf.mxu0
        %2324 = vmatprep.mubr.f32.mxu0 %v1752
        %2325 = vmatmul.mubr.f32.gmra.mxu0 %v1720
        %v2326 = vpop.f32.mrf.mxu0
        %v2327 = vadd.f32 %v2102, %v2326
        %v2328 = vpop.f32.mrf.mxu0
        %2329 = vmatprep.mubr.f32.mxu0 %v1753
        %2330 = vmatmul.mubr.f32.gmra.mxu0 %v1721
        %v2331 = vpop.f32.mrf.mxu0
        %v2332 = vadd.f32 %v2107, %v2331
        %v2333 = vpop.f32.mrf.mxu0
        %2334 = vmatprep.mubr.f32.mxu0 %v1754
        %2335 = vmatmul.mubr.f32.gmra.mxu0 %v1722
        %v2336 = vpop.f32.mrf.mxu0
        %v2337 = vadd.f32 %v2112, %v2336
        %v2338 = vpop.f32.mrf.mxu0
        %2339 = vmatprep.mubr.f32.mxu0 %v1755
        %2340 = vmatmul.mubr.f32.gmra.mxu0 %v1723
        %v2341 = vpop.f32.mrf.mxu0
        %v2342 = vadd.f32 %v2117, %v2341
        %v2343 = vpop.f32.mrf.mxu0
        %2344 = vmatprep.mubr.f32.mxu0 %v1756
        %2345 = vmatmul.mubr.f32.gmra.mxu0 %v1724
        %v2346 = vpop.f32.mrf.mxu0
        %v2347 = vadd.f32 %v2122, %v2346
        %v2348 = vpop.f32.mrf.mxu0
        %2349 = vmatprep.mubr.f32.mxu0 %v1757
        %2350 = vmatmul.mubr.f32.gmra.mxu0 %v1725
        %v2351 = vpop.f32.mrf.mxu0
        %v2352 = vadd.f32 %v2127, %v2351
        %v2353 = vpop.f32.mrf.mxu0
        %2354 = vmatprep.mubr.f32.mxu0 %v1758
        %2355 = vmatmul.mubr.f32.gmra.mxu0 %v1726
        %v2356 = vpop.f32.mrf.mxu0
        %v2357 = vadd.f32 %v2132, %v2356
        %v2358 = vpop.f32.mrf.mxu0
        %2359 = vmatprep.mubr.f32.mxu0 %v1759
        %2360 = vmatmul.mubr.f32.gmra.mxu0 %v1727
        %v2361 = vpop.f32.mrf.mxu0
        %v2362 = vadd.f32 %v2137, %v2361
        %v2363 = vpop.f32.mrf.mxu0
        %2364 = vmatprep.mubr.f32.mxu0 %v1760
        %2365 = vmatmul.mubr.f32.gmra.mxu0 %v1728
        %v2366 = vpop.f32.mrf.mxu0
        %v2367 = vadd.f32 %v2142, %v2366
        %v2368 = vpop.f32.mrf.mxu0
        %2369 = vmatprep.mubr.f32.mxu0 %v1761
        %2370 = vmatmul.mubr.f32.gmra.mxu0 %v1729
        %v2371 = vpop.f32.mrf.mxu0
        %v2372 = vadd.f32 %v2147, %v2371
        %v2373 = vpop.f32.mrf.mxu0
        %2374 = vmatprep.mubr.f32.mxu0 %v1762
        %2375 = vmatmul.mubr.f32.gmra.mxu0 %v1730
        %v2376 = vpop.f32.mrf.mxu0
        %v2377 = vadd.f32 %v2152, %v2376
        %v2378 = vpop.f32.mrf.mxu0
        %2379 = vmatprep.mubr.f32.mxu0 %v1763
        %2380 = vmatmul.mubr.f32.gmra.mxu0 %v1731
        %v2381 = vpop.f32.mrf.mxu0
        %v2382 = vadd.f32 %v2157, %v2381
        %v2383 = vpop.f32.mrf.mxu0
        %2384 = vmatprep.mubr.f32.mxu0 %v1764
        %2385 = vmatmul.mubr.f32.gmra.mxu0 %v1732
        %v2386 = vpop.f32.mrf.mxu0
        %v2387 = vadd.f32 %v2162, %v2386
        %v2388 = vpop.f32.mrf.mxu0
        %2389 = vdwg.mxu0
        %2390 = vmatprep.subr.mxu0 0.0
        %2391 = vmatpush1.msra.mxu0 0.0
        %2392 = vmatprep.subr.mxu0 0.0
        %2393 = vmatpush1.msra.mxu0 0.0
        %2394 = vmatprep.subr.mxu0 0.0
        %2395 = vmatpush1.msra.mxu0 0.0
        %2396 = vmatprep.subr.mxu0 0.0
        %2397 = vmatpush1.msra.mxu0 0.0
        %2398 = vmatprep.subr.mxu0 0.0
        %2399 = vmatpush1.msra.mxu0 0.0
        %2400 = vmatprep.subr.mxu0 0.0
        %2401 = vmatpush1.msra.mxu0 0.0
        %2402 = vmatprep.subr.mxu0 0.0
        %2403 = vmatpush1.msra.mxu0 0.0
        %2404 = vmatprep.subr.mxu0 0.0
        %2405 = vmatpush1.msra.mxu0 0.0
        %2406 = vmatprep.subr.mxu0 0.0
        %2407 = vmatpush1.msra.mxu0 %v1836
        %2408 = vmatprep.subr.mxu0 0.0
        %2409 = vmatpush1.msra.mxu0 %v1835
        %2410 = vmatprep.subr.mxu0 0.0
        %2411 = vmatpush1.msra.mxu0 %v1834
        %2412 = vmatprep.subr.mxu0 0.0
        %2413 = vmatpush1.msra.mxu0 %v1833
        %2414 = vmatprep.subr.mxu0 0.0
        %2415 = vmatpush1.msra.mxu0 %v1832
        %2416 = vmatprep.subr.mxu0 0.0
        %2417 = vmatpush1.msra.mxu0 %v1831
        %2418 = vmatprep.subr.mxu0 0.0
        %2419 = vmatpush1.msra.mxu0 %v1830
        %2420 = vmatprep.subr.mxu0 0.0
        %2421 = vmatpush1.msra.mxu0 %v1829
        %2422 = vmatprep.subr.mxu0 0.0
        %2423 = vmatpush2.msra.mxu0 0.0
        %2424 = vmatprep.subr.mxu0 0.0
        %2425 = vmatpush2.msra.mxu0 0.0
        %2426 = vmatprep.subr.mxu0 0.0
        %2427 = vmatpush2.msra.mxu0 0.0
        %2428 = vmatprep.subr.mxu0 0.0
        %2429 = vmatpush2.msra.mxu0 0.0
        %2430 = vmatprep.subr.mxu0 0.0
        %2431 = vmatpush2.msra.mxu0 0.0
        %2432 = vmatprep.subr.mxu0 0.0
        %2433 = vmatpush2.msra.mxu0 0.0
        %2434 = vmatprep.subr.mxu0 0.0
        %2435 = vmatpush2.msra.mxu0 0.0
        %2436 = vmatprep.subr.mxu0 0.0
        %2437 = vmatpush2.msra.mxu0 0.0
        %2438 = vmatprep.subr.mxu0 0.0
        %2439 = vmatpush2.msra.mxu0 0.0
        %2440 = vmatprep.subr.mxu0 0.0
        %2441 = vmatpush2.msra.mxu0 0.0
        %2442 = vmatprep.subr.mxu0 0.0
        %2443 = vmatpush2.msra.mxu0 0.0
        %2444 = vmatprep.subr.mxu0 0.0
        %2445 = vmatpush2.msra.mxu0 0.0
        %2446 = vmatprep.subr.mxu0 0.0
        %2447 = vmatpush2.msra.mxu0 0.0
        %2448 = vmatprep.subr.mxu0 0.0
        %2449 = vmatpush2.msra.mxu0 0.0
        %2450 = vmatprep.subr.mxu0 0.0
        %2451 = vmatpush2.msra.mxu0 0.0
        %2452 = vmatprep.subr.mxu0 0.0
        %2453 = vmatpush2.msra.mxu0 0.0
        %2454 = vmatprep.mubr.f32.mxu0 0.0
        %2455 = vmatmul.mubr.f32.gmra.mxu0 %v1845
        %v2456 = vpop.f32.mrf.mxu0
        %v2457 = vadd.f32 %v2232, %v2456
        %v2458 = vpop.f32.mrf.mxu0
        %2459 = vmatprep.mubr.f32.mxu0 0.0
        %2460 = vmatmul.mubr.f32.gmra.mxu0 %v1848
        %v2461 = vpop.f32.mrf.mxu0
        %v2462 = vadd.f32 %v2237, %v2461
        %v2463 = vpop.f32.mrf.mxu0
        %2464 = vmatprep.mubr.f32.mxu0 0.0
        %2465 = vmatmul.mubr.f32.gmra.mxu0 %v1851
        %v2466 = vpop.f32.mrf.mxu0
        %v2467 = vadd.f32 %v2242, %v2466
        %v2468 = vpop.f32.mrf.mxu0
        %2469 = vmatprep.mubr.f32.mxu0 0.0
        %2470 = vmatmul.mubr.f32.gmra.mxu0 %v1854
        %v2471 = vpop.f32.mrf.mxu0
        %v2472 = vadd.f32 %v2247, %v2471
        %v2473 = vpop.f32.mrf.mxu0
        %2474 = vmatprep.mubr.f32.mxu0 0.0
        %2475 = vmatmul.mubr.f32.gmra.mxu0 %v1857
        %v2476 = vpop.f32.mrf.mxu0
        %v2477 = vadd.f32 %v2252, %v2476
        %v2478 = vpop.f32.mrf.mxu0
        %2479 = vmatprep.mubr.f32.mxu0 0.0
        %2480 = vmatmul.mubr.f32.gmra.mxu0 %v1860
        %v2481 = vpop.f32.mrf.mxu0
        %v2482 = vadd.f32 %v2257, %v2481
        %v2483 = vpop.f32.mrf.mxu0
        %2484 = vmatprep.mubr.f32.mxu0 0.0
        %2485 = vmatmul.mubr.f32.gmra.mxu0 %v1863
        %v2486 = vpop.f32.mrf.mxu0
        %v2487 = vadd.f32 %v2262, %v2486
        %v2488 = vpop.f32.mrf.mxu0
        %2489 = vmatprep.mubr.f32.mxu0 0.0
        %2490 = vmatmul.mubr.f32.gmra.mxu0 %v1866
        %v2491 = vpop.f32.mrf.mxu0
        %v2492 = vadd.f32 %v2267, %v2491
        %v2493 = vpop.f32.mrf.mxu0
        %2494 = vmatprep.mubr.f32.mxu0 0.0
        %2495 = vmatmul.mubr.f32.gmra.mxu0 %v1869
        %v2496 = vpop.f32.mrf.mxu0
        %v2497 = vadd.f32 %v2272, %v2496
        %v2498 = vpop.f32.mrf.mxu0
        %2499 = vmatprep.mubr.f32.mxu0 0.0
        %2500 = vmatmul.mubr.f32.gmra.mxu0 %v1872
        %v2501 = vpop.f32.mrf.mxu0
        %v2502 = vadd.f32 %v2277, %v2501
        %v2503 = vpop.f32.mrf.mxu0
        %2504 = vmatprep.mubr.f32.mxu0 0.0
        %2505 = vmatmul.mubr.f32.gmra.mxu0 %v1875
        %v2506 = vpop.f32.mrf.mxu0
        %v2507 = vadd.f32 %v2282, %v2506
        %v2508 = vpop.f32.mrf.mxu0
        %2509 = vmatprep.mubr.f32.mxu0 0.0
        %2510 = vmatmul.mubr.f32.gmra.mxu0 %v1878
        %v2511 = vpop.f32.mrf.mxu0
        %v2512 = vadd.f32 %v2287, %v2511
        %v2513 = vpop.f32.mrf.mxu0
        %2514 = vmatprep.mubr.f32.mxu0 0.0
        %2515 = vmatmul.mubr.f32.gmra.mxu0 %v1881
        %v2516 = vpop.f32.mrf.mxu0
        %v2517 = vadd.f32 %v2292, %v2516
        %v2518 = vpop.f32.mrf.mxu0
        %2519 = vmatprep.mubr.f32.mxu0 0.0
        %2520 = vmatmul.mubr.f32.gmra.mxu0 %v1884
        %v2521 = vpop.f32.mrf.mxu0
        %v2522 = vadd.f32 %v2297, %v2521
        %v2523 = vpop.f32.mrf.mxu0
        %2524 = vmatprep.mubr.f32.mxu0 0.0
        %2525 = vmatmul.mubr.f32.gmra.mxu0 %v1887
        %v2526 = vpop.f32.mrf.mxu0
        %v2527 = vadd.f32 %v2302, %v2526
        %v2528 = vpop.f32.mrf.mxu0
        %2529 = vmatprep.mubr.f32.mxu0 0.0
        %2530 = vmatmul.mubr.f32.gmra.mxu0 %v1890
        %v2531 = vpop.f32.mrf.mxu0
        %v2532 = vadd.f32 %v2307, %v2531
        %v2533 = vpop.f32.mrf.mxu0
        %2534 = vmatprep.mubr.f32.mxu0 0.0
        %2535 = vmatmul.mubr.f32.gmra.mxu0 %v1893
        %v2536 = vpop.f32.mrf.mxu0
        %v2537 = vadd.f32 %v2312, %v2536
        %v2538 = vpop.f32.mrf.mxu0
        %2539 = vmatprep.mubr.f32.mxu0 0.0
        %2540 = vmatmul.mubr.f32.gmra.mxu0 %v1896
        %v2541 = vpop.f32.mrf.mxu0
        %v2542 = vadd.f32 %v2317, %v2541
        %v2543 = vpop.f32.mrf.mxu0
        %2544 = vmatprep.mubr.f32.mxu0 0.0
        %2545 = vmatmul.mubr.f32.gmra.mxu0 %v1899
        %v2546 = vpop.f32.mrf.mxu0
        %v2547 = vadd.f32 %v2322, %v2546
        %v2548 = vpop.f32.mrf.mxu0
        %2549 = vmatprep.mubr.f32.mxu0 0.0
        %2550 = vmatmul.mubr.f32.gmra.mxu0 %v1902
        %v2551 = vpop.f32.mrf.mxu0
        %v2552 = vadd.f32 %v2327, %v2551
        %v2553 = vpop.f32.mrf.mxu0
        %2554 = vmatprep.mubr.f32.mxu0 0.0
        %2555 = vmatmul.mubr.f32.gmra.mxu0 %v1905
        %v2556 = vpop.f32.mrf.mxu0
        %v2557 = vadd.f32 %v2332, %v2556
        %v2558 = vpop.f32.mrf.mxu0
        %2559 = vmatprep.mubr.f32.mxu0 0.0
        %2560 = vmatmul.mubr.f32.gmra.mxu0 %v1908
        %v2561 = vpop.f32.mrf.mxu0
        %v2562 = vadd.f32 %v2337, %v2561
        %v2563 = vpop.f32.mrf.mxu0
        %2564 = vmatprep.mubr.f32.mxu0 0.0
        %2565 = vmatmul.mubr.f32.gmra.mxu0 %v1911
        %v2566 = vpop.f32.mrf.mxu0
        %v2567 = vadd.f32 %v2342, %v2566
        %v2568 = vpop.f32.mrf.mxu0
        %2569 = vmatprep.mubr.f32.mxu0 0.0
        %2570 = vmatmul.mubr.f32.gmra.mxu0 %v1914
        %v2571 = vpop.f32.mrf.mxu0
        %v2572 = vadd.f32 %v2347, %v2571
        %v2573 = vpop.f32.mrf.mxu0
        %2574 = vmatprep.mubr.f32.mxu0 0.0
        %2575 = vmatmul.mubr.f32.gmra.mxu0 %v1917
        %v2576 = vpop.f32.mrf.mxu0
        %v2577 = vadd.f32 %v2352, %v2576
        %v2578 = vpop.f32.mrf.mxu0
        %2579 = vmatprep.mubr.f32.mxu0 0.0
        %2580 = vmatmul.mubr.f32.gmra.mxu0 %v1920
        %v2581 = vpop.f32.mrf.mxu0
        %v2582 = vadd.f32 %v2357, %v2581
        %v2583 = vpop.f32.mrf.mxu0
        %2584 = vmatprep.mubr.f32.mxu0 0.0
        %2585 = vmatmul.mubr.f32.gmra.mxu0 %v1923
        %v2586 = vpop.f32.mrf.mxu0
        %v2587 = vadd.f32 %v2362, %v2586
        %v2588 = vpop.f32.mrf.mxu0
        %2589 = vmatprep.mubr.f32.mxu0 0.0
        %2590 = vmatmul.mubr.f32.gmra.mxu0 %v1926
        %v2591 = vpop.f32.mrf.mxu0
        %v2592 = vadd.f32 %v2367, %v2591
        %v2593 = vpop.f32.mrf.mxu0
        %2594 = vmatprep.mubr.f32.mxu0 0.0
        %2595 = vmatmul.mubr.f32.gmra.mxu0 %v1929
        %v2596 = vpop.f32.mrf.mxu0
        %v2597 = vadd.f32 %v2372, %v2596
        %v2598 = vpop.f32.mrf.mxu0
        %2599 = vmatprep.mubr.f32.mxu0 0.0
        %2600 = vmatmul.mubr.f32.gmra.mxu0 %v1932
        %v2601 = vpop.f32.mrf.mxu0
        %v2602 = vadd.f32 %v2377, %v2601
        %v2603 = vpop.f32.mrf.mxu0
        %2604 = vmatprep.mubr.f32.mxu0 0.0
        %2605 = vmatmul.mubr.f32.gmra.mxu0 %v1935
        %v2606 = vpop.f32.mrf.mxu0
        %v2607 = vadd.f32 %v2382, %v2606
        %v2608 = vpop.f32.mrf.mxu0
        %2609 = vmatprep.mubr.f32.mxu0 0.0
        %2610 = vmatmul.mubr.f32.gmra.mxu0 %v1938
        %v2611 = vpop.f32.mrf.mxu0
        %v2612 = vadd.f32 %v2387, %v2611
        %v2613 = vpop.f32.mrf.mxu0
        %2614 = vdwg.mxu0
        %v2615 = vmax.f32 %v2457, 0.0
        %v2616 = vmax.f32 %v2462, 0.0
        %v2617 = vmax.f32 %v2467, 0.0
        %v2618 = vmax.f32 %v2472, 0.0
        %v2619 = vmax.f32 %v2477, 0.0
        %v2620 = vmax.f32 %v2482, 0.0
        %v2621 = vmax.f32 %v2487, 0.0
        %v2622 = vmax.f32 %v2492, 0.0
        %v2623 = vmax.f32 %v2497, 0.0
        %v2624 = vmax.f32 %v2502, 0.0
        %v2625 = vmax.f32 %v2507, 0.0
        %v2626 = vmax.f32 %v2512, 0.0
        %v2627 = vmax.f32 %v2517, 0.0
        %v2628 = vmax.f32 %v2522, 0.0
        %v2629 = vmax.f32 %v2527, 0.0
        %v2630 = vmax.f32 %v2532, 0.0
        %v2631 = vmax.f32 %v2537, 0.0
        %v2632 = vmax.f32 %v2542, 0.0
        %v2633 = vmax.f32 %v2547, 0.0
        %v2634 = vmax.f32 %v2552, 0.0
        %v2635 = vmax.f32 %v2557, 0.0
        %v2636 = vmax.f32 %v2562, 0.0
        %v2637 = vmax.f32 %v2567, 0.0
        %v2638 = vmax.f32 %v2572, 0.0
        %v2639 = vmax.f32 %v2577, 0.0
        %v2640 = vmax.f32 %v2582, 0.0
        %v2641 = vmax.f32 %v2587, 0.0
        %v2642 = vmax.f32 %v2592, 0.0
        %v2643 = vmax.f32 %v2597, 0.0
        %v2644 = vmax.f32 %v2602, 0.0
        %v2645 = vmax.f32 %v2607, 0.0
        %v2646 = vmax.f32 %v2612, 0.0
        %v2647 = vld [vmem:[%s5] sm:$0xff]
        %v2648 = vld [vmem:[%s5 + $0x8] sm:$0xff]
        %v2649 = vld [vmem:[%s5 + $0x10] sm:$0xff]
        %v2650 = vld [vmem:[%s5 + $0x18] sm:$0xff]
        %v2651 = vld [vmem:[%s5 + $0x20] sm:$0xff]
        %v2652 = vld [vmem:[%s5 + $0x28] sm:$0xff]
        %v2653 = vld [vmem:[%s5 + $0x30] sm:$0xff]
        %v2654 = vld [vmem:[%s5 + $0x38] sm:$0xff]
        %v2655 = vld [vmem:[%s6] sm:$0x1]
        %v2657 = vlaneseq
        %v2658 = vshrl.u32 %v2657, 7
        %v2659 = vsub.s32 0, %v2658
        %v2660 = vrot.slane %v2655, %v2659
        %v2663 = vsel %vm747, %v2615, 0
        %v2666 = vsel %vm747, %v2616, 0
        %v2669 = vsel %vm747, %v2617, 0
        %v2672 = vsel %vm747, %v2618, 0
        %v2675 = vsel %vm747, %v2619, 0
        %v2678 = vsel %vm747, %v2620, 0
        %v2681 = vsel %vm747, %v2621, 0
        %v2684 = vsel %vm747, %v2622, 0
        %v2687 = vsel %vm747, %v2623, 0
        %v2690 = vsel %vm747, %v2624, 0
        %v2693 = vsel %vm747, %v2625, 0
        %v2696 = vsel %vm747, %v2626, 0
        %v2699 = vsel %vm747, %v2627, 0
        %v2702 = vsel %vm747, %v2628, 0
        %v2705 = vsel %vm747, %v2629, 0
        %v2708 = vsel %vm747, %v2630, 0
        %v2711 = vsel %vm747, %v2631, 0
        %v2714 = vsel %vm747, %v2632, 0
        %v2717 = vsel %vm747, %v2633, 0
        %v2720 = vsel %vm747, %v2634, 0
        %v2723 = vsel %vm747, %v2635, 0
        %v2726 = vsel %vm747, %v2636, 0
        %v2729 = vsel %vm747, %v2637, 0
        %v2732 = vsel %vm747, %v2638, 0
        %v2735 = vsel %vm747, %v2639, 0
        %v2738 = vsel %vm747, %v2640, 0
        %v2741 = vsel %vm747, %v2641, 0
        %v2744 = vsel %vm747, %v2642, 0
        %v2747 = vsel %vm747, %v2643, 0
        %v2750 = vsel %vm747, %v2644, 0
        %v2753 = vsel %vm747, %v2645, 0
        %v2756 = vsel %vm747, %v2646, 0
        %2758 = vmatprep.subr.mxu0 0.0
        %2759 = vmatpush1.msra.mxu0 0.0
        %2760 = vmatprep.subr.mxu0 0.0
        %2761 = vmatpush1.msra.mxu0 0.0
        %2762 = vmatprep.subr.mxu0 0.0
        %2763 = vmatpush1.msra.mxu0 0.0
        %2764 = vmatprep.subr.mxu0 0.0
        %2765 = vmatpush1.msra.mxu0 0.0
        %2766 = vmatprep.subr.mxu0 0.0
        %2767 = vmatpush1.msra.mxu0 0.0
        %2768 = vmatprep.subr.mxu0 0.0
        %2769 = vmatpush1.msra.mxu0 0.0
        %2770 = vmatprep.subr.mxu0 0.0
        %2771 = vmatpush1.msra.mxu0 0.0
        %2772 = vmatprep.subr.mxu0 0.0
        %2773 = vmatpush1.msra.mxu0 0.0
        %2774 = vmatprep.subr.mxu0 0.0
        %2775 = vmatpush1.msra.mxu0 %v2654
        %2776 = vmatprep.subr.mxu0 0.0
        %2777 = vmatpush1.msra.mxu0 %v2653
        %2778 = vmatprep.subr.mxu0 0.0
        %2779 = vmatpush1.msra.mxu0 %v2652
        %2780 = vmatprep.subr.mxu0 0.0
        %2781 = vmatpush1.msra.mxu0 %v2651
        %2782 = vmatprep.subr.mxu0 0.0
        %2783 = vmatpush1.msra.mxu0 %v2650
        %2784 = vmatprep.subr.mxu0 0.0
        %2785 = vmatpush1.msra.mxu0 %v2649
        %2786 = vmatprep.subr.mxu0 0.0
        %2787 = vmatpush1.msra.mxu0 %v2648
        %2788 = vmatprep.subr.mxu0 0.0
        %2789 = vmatpush1.msra.mxu0 %v2647
        %2790 = vmatprep.subr.mxu0 0.0
        %2791 = vmatpush2.msra.mxu0 0.0
        %2792 = vmatprep.subr.mxu0 0.0
        %2793 = vmatpush2.msra.mxu0 0.0
        %2794 = vmatprep.subr.mxu0 0.0
        %2795 = vmatpush2.msra.mxu0 0.0
        %2796 = vmatprep.subr.mxu0 0.0
        %2797 = vmatpush2.msra.mxu0 0.0
        %2798 = vmatprep.subr.mxu0 0.0
        %2799 = vmatpush2.msra.mxu0 0.0
        %2800 = vmatprep.subr.mxu0 0.0
        %2801 = vmatpush2.msra.mxu0 0.0
        %2802 = vmatprep.subr.mxu0 0.0
        %2803 = vmatpush2.msra.mxu0 0.0
        %2804 = vmatprep.subr.mxu0 0.0
        %2805 = vmatpush2.msra.mxu0 0.0
        %2806 = vmatprep.subr.mxu0 0.0
        %2807 = vmatpush2.msra.mxu0 0.0
        %2808 = vmatprep.subr.mxu0 0.0
        %2809 = vmatpush2.msra.mxu0 0.0
        %2810 = vmatprep.subr.mxu0 0.0
        %2811 = vmatpush2.msra.mxu0 0.0
        %2812 = vmatprep.subr.mxu0 0.0
        %2813 = vmatpush2.msra.mxu0 0.0
        %2814 = vmatprep.subr.mxu0 0.0
        %2815 = vmatpush2.msra.mxu0 0.0
        %2816 = vmatprep.subr.mxu0 0.0
        %2817 = vmatpush2.msra.mxu0 0.0
        %2818 = vmatprep.subr.mxu0 0.0
        %2819 = vmatpush2.msra.mxu0 0.0
        %2820 = vmatprep.subr.mxu0 0.0
        %2821 = vmatpush2.msra.mxu0 0.0
        %2822 = vmatprep.mubr.f32.mxu0 0.0
        %2823 = vmatmul.mubr.f32.gmra.mxu0 %v2663
        %v2824 = vpop.f32.mrf.mxu0
        %v2825 = vadd.f32 %v2660, %v2824
        %v2826 = vpop.f32.mrf.mxu0
        %2827 = vmatprep.mubr.f32.mxu0 0.0
        %2828 = vmatmul.mubr.f32.gmra.mxu0 %v2666
        %v2829 = vpop.f32.mrf.mxu0
        %v2830 = vadd.f32 %v2660, %v2829
        %v2831 = vpop.f32.mrf.mxu0
        %2832 = vmatprep.mubr.f32.mxu0 0.0
        %2833 = vmatmul.mubr.f32.gmra.mxu0 %v2669
        %v2834 = vpop.f32.mrf.mxu0
        %v2835 = vadd.f32 %v2660, %v2834
        %v2836 = vpop.f32.mrf.mxu0
        %2837 = vmatprep.mubr.f32.mxu0 0.0
        %2838 = vmatmul.mubr.f32.gmra.mxu0 %v2672
        %v2839 = vpop.f32.mrf.mxu0
        %v2840 = vadd.f32 %v2660, %v2839
        %v2841 = vpop.f32.mrf.mxu0
        %2842 = vmatprep.mubr.f32.mxu0 0.0
        %2843 = vmatmul.mubr.f32.gmra.mxu0 %v2675
        %v2844 = vpop.f32.mrf.mxu0
        %v2845 = vadd.f32 %v2660, %v2844
        %v2846 = vpop.f32.mrf.mxu0
        %2847 = vmatprep.mubr.f32.mxu0 0.0
        %2848 = vmatmul.mubr.f32.gmra.mxu0 %v2678
        %v2849 = vpop.f32.mrf.mxu0
        %v2850 = vadd.f32 %v2660, %v2849
        %v2851 = vpop.f32.mrf.mxu0
        %2852 = vmatprep.mubr.f32.mxu0 0.0
        %2853 = vmatmul.mubr.f32.gmra.mxu0 %v2681
        %v2854 = vpop.f32.mrf.mxu0
        %v2855 = vadd.f32 %v2660, %v2854
        %v2856 = vpop.f32.mrf.mxu0
        %2857 = vmatprep.mubr.f32.mxu0 0.0
        %2858 = vmatmul.mubr.f32.gmra.mxu0 %v2684
        %v2859 = vpop.f32.mrf.mxu0
        %v2860 = vadd.f32 %v2660, %v2859
        %v2861 = vpop.f32.mrf.mxu0
        %2862 = vmatprep.mubr.f32.mxu0 0.0
        %2863 = vmatmul.mubr.f32.gmra.mxu0 %v2687
        %v2864 = vpop.f32.mrf.mxu0
        %v2865 = vadd.f32 %v2660, %v2864
        %v2866 = vpop.f32.mrf.mxu0
        %2867 = vmatprep.mubr.f32.mxu0 0.0
        %2868 = vmatmul.mubr.f32.gmra.mxu0 %v2690
        %v2869 = vpop.f32.mrf.mxu0
        %v2870 = vadd.f32 %v2660, %v2869
        %v2871 = vpop.f32.mrf.mxu0
        %2872 = vmatprep.mubr.f32.mxu0 0.0
        %2873 = vmatmul.mubr.f32.gmra.mxu0 %v2693
        %v2874 = vpop.f32.mrf.mxu0
        %v2875 = vadd.f32 %v2660, %v2874
        %v2876 = vpop.f32.mrf.mxu0
        %2877 = vmatprep.mubr.f32.mxu0 0.0
        %2878 = vmatmul.mubr.f32.gmra.mxu0 %v2696
        %v2879 = vpop.f32.mrf.mxu0
        %v2880 = vadd.f32 %v2660, %v2879
        %v2881 = vpop.f32.mrf.mxu0
        %2882 = vmatprep.mubr.f32.mxu0 0.0
        %2883 = vmatmul.mubr.f32.gmra.mxu0 %v2699
        %v2884 = vpop.f32.mrf.mxu0
        %v2885 = vadd.f32 %v2660, %v2884
        %v2886 = vpop.f32.mrf.mxu0
        %2887 = vmatprep.mubr.f32.mxu0 0.0
        %2888 = vmatmul.mubr.f32.gmra.mxu0 %v2702
        %v2889 = vpop.f32.mrf.mxu0
        %v2890 = vadd.f32 %v2660, %v2889
        %v2891 = vpop.f32.mrf.mxu0
        %2892 = vmatprep.mubr.f32.mxu0 0.0
        %2893 = vmatmul.mubr.f32.gmra.mxu0 %v2705
        %v2894 = vpop.f32.mrf.mxu0
        %v2895 = vadd.f32 %v2660, %v2894
        %v2896 = vpop.f32.mrf.mxu0
        %2897 = vmatprep.mubr.f32.mxu0 0.0
        %2898 = vmatmul.mubr.f32.gmra.mxu0 %v2708
        %v2899 = vpop.f32.mrf.mxu0
        %v2900 = vadd.f32 %v2660, %v2899
        %v2901 = vpop.f32.mrf.mxu0
        %2902 = vmatprep.mubr.f32.mxu0 0.0
        %2903 = vmatmul.mubr.f32.gmra.mxu0 %v2711
        %v2904 = vpop.f32.mrf.mxu0
        %v2905 = vadd.f32 %v2660, %v2904
        %v2906 = vpop.f32.mrf.mxu0
        %2907 = vmatprep.mubr.f32.mxu0 0.0
        %2908 = vmatmul.mubr.f32.gmra.mxu0 %v2714
        %v2909 = vpop.f32.mrf.mxu0
        %v2910 = vadd.f32 %v2660, %v2909
        %v2911 = vpop.f32.mrf.mxu0
        %2912 = vmatprep.mubr.f32.mxu0 0.0
        %2913 = vmatmul.mubr.f32.gmra.mxu0 %v2717
        %v2914 = vpop.f32.mrf.mxu0
        %v2915 = vadd.f32 %v2660, %v2914
        %v2916 = vpop.f32.mrf.mxu0
        %2917 = vmatprep.mubr.f32.mxu0 0.0
        %2918 = vmatmul.mubr.f32.gmra.mxu0 %v2720
        %v2919 = vpop.f32.mrf.mxu0
        %v2920 = vadd.f32 %v2660, %v2919
        %v2921 = vpop.f32.mrf.mxu0
        %2922 = vmatprep.mubr.f32.mxu0 0.0
        %2923 = vmatmul.mubr.f32.gmra.mxu0 %v2723
        %v2924 = vpop.f32.mrf.mxu0
        %v2925 = vadd.f32 %v2660, %v2924
        %v2926 = vpop.f32.mrf.mxu0
        %2927 = vmatprep.mubr.f32.mxu0 0.0
        %2928 = vmatmul.mubr.f32.gmra.mxu0 %v2726
        %v2929 = vpop.f32.mrf.mxu0
        %v2930 = vadd.f32 %v2660, %v2929
        %v2931 = vpop.f32.mrf.mxu0
        %2932 = vmatprep.mubr.f32.mxu0 0.0
        %2933 = vmatmul.mubr.f32.gmra.mxu0 %v2729
        %v2934 = vpop.f32.mrf.mxu0
        %v2935 = vadd.f32 %v2660, %v2934
        %v2936 = vpop.f32.mrf.mxu0
        %2937 = vmatprep.mubr.f32.mxu0 0.0
        %2938 = vmatmul.mubr.f32.gmra.mxu0 %v2732
        %v2939 = vpop.f32.mrf.mxu0
        %v2940 = vadd.f32 %v2660, %v2939
        %v2941 = vpop.f32.mrf.mxu0
        %2942 = vmatprep.mubr.f32.mxu0 0.0
        %2943 = vmatmul.mubr.f32.gmra.mxu0 %v2735
        %v2944 = vpop.f32.mrf.mxu0
        %v2945 = vadd.f32 %v2660, %v2944
        %v2946 = vpop.f32.mrf.mxu0
        %2947 = vmatprep.mubr.f32.mxu0 0.0
        %2948 = vmatmul.mubr.f32.gmra.mxu0 %v2738
        %v2949 = vpop.f32.mrf.mxu0
        %v2950 = vadd.f32 %v2660, %v2949
        %v2951 = vpop.f32.mrf.mxu0
        %2952 = vmatprep.mubr.f32.mxu0 0.0
        %2953 = vmatmul.mubr.f32.gmra.mxu0 %v2741
        %v2954 = vpop.f32.mrf.mxu0
        %v2955 = vadd.f32 %v2660, %v2954
        %v2956 = vpop.f32.mrf.mxu0
        %2957 = vmatprep.mubr.f32.mxu0 0.0
        %2958 = vmatmul.mubr.f32.gmra.mxu0 %v2744
        %v2959 = vpop.f32.mrf.mxu0
        %v2960 = vadd.f32 %v2660, %v2959
        %v2961 = vpop.f32.mrf.mxu0
        %2962 = vmatprep.mubr.f32.mxu0 0.0
        %2963 = vmatmul.mubr.f32.gmra.mxu0 %v2747
        %v2964 = vpop.f32.mrf.mxu0
        %v2965 = vadd.f32 %v2660, %v2964
        %v2966 = vpop.f32.mrf.mxu0
        %2967 = vmatprep.mubr.f32.mxu0 0.0
        %2968 = vmatmul.mubr.f32.gmra.mxu0 %v2750
        %v2969 = vpop.f32.mrf.mxu0
        %v2970 = vadd.f32 %v2660, %v2969
        %v2971 = vpop.f32.mrf.mxu0
        %2972 = vmatprep.mubr.f32.mxu0 0.0
        %2973 = vmatmul.mubr.f32.gmra.mxu0 %v2753
        %v2974 = vpop.f32.mrf.mxu0
        %v2975 = vadd.f32 %v2660, %v2974
        %v2976 = vpop.f32.mrf.mxu0
        %2977 = vmatprep.mubr.f32.mxu0 0.0
        %2978 = vmatmul.mubr.f32.gmra.mxu0 %v2756
        %v2979 = vpop.f32.mrf.mxu0
        %v2980 = vadd.f32 %v2660, %v2979
        %v2981 = vpop.f32.mrf.mxu0
        %2982 = vdwg.mxu0
        %v2983 = vadd.f32 %v2825, %v683
        %v2984 = vadd.f32 %v2830, %v685
        %v2985 = vadd.f32 %v2835, %v687
        %v2986 = vadd.f32 %v2840, %v689
        %v2987 = vadd.f32 %v2845, %v691
        %v2988 = vadd.f32 %v2850, %v693
        %v2989 = vadd.f32 %v2855, %v695
        %v2990 = vadd.f32 %v2860, %v697
        %v2991 = vadd.f32 %v2865, %v699
        %v2992 = vadd.f32 %v2870, %v701
        %v2993 = vadd.f32 %v2875, %v703
        %v2994 = vadd.f32 %v2880, %v705
        %v2995 = vadd.f32 %v2885, %v707
        %v2996 = vadd.f32 %v2890, %v709
        %v2997 = vadd.f32 %v2895, %v711
        %v2998 = vadd.f32 %v2900, %v713
        %v2999 = vadd.f32 %v2905, %v715
        %v3000 = vadd.f32 %v2910, %v717
        %v3001 = vadd.f32 %v2915, %v719
        %v3002 = vadd.f32 %v2920, %v721
        %v3003 = vadd.f32 %v2925, %v723
        %v3004 = vadd.f32 %v2930, %v725
        %v3005 = vadd.f32 %v2935, %v727
        %v3006 = vadd.f32 %v2940, %v729
        %v3007 = vadd.f32 %v2945, %v731
        %v3008 = vadd.f32 %v2950, %v733
        %v3009 = vadd.f32 %v2955, %v735
        %v3010 = vadd.f32 %v2960, %v737
        %v3011 = vadd.f32 %v2965, %v739
        %v3012 = vadd.f32 %v2970, %v741
        %v3013 = vadd.f32 %v2975, %v743
        %v3014 = vadd.f32 %v2980, %v745
        %v3015 = vmax.f32 %v2983, 0.0
        %v3016 = vmax.f32 %v2984, 0.0
        %v3017 = vmax.f32 %v2985, 0.0
        %v3018 = vmax.f32 %v2986, 0.0
        %v3019 = vmax.f32 %v2987, 0.0
        %v3020 = vmax.f32 %v2988, 0.0
        %v3021 = vmax.f32 %v2989, 0.0
        %v3022 = vmax.f32 %v2990, 0.0
        %v3023 = vmax.f32 %v2991, 0.0
        %v3024 = vmax.f32 %v2992, 0.0
        %v3025 = vmax.f32 %v2993, 0.0
        %v3026 = vmax.f32 %v2994, 0.0
        %v3027 = vmax.f32 %v2995, 0.0
        %v3028 = vmax.f32 %v2996, 0.0
        %v3029 = vmax.f32 %v2997, 0.0
        %v3030 = vmax.f32 %v2998, 0.0
        %v3031 = vmax.f32 %v2999, 0.0
        %v3032 = vmax.f32 %v3000, 0.0
        %v3033 = vmax.f32 %v3001, 0.0
        %v3034 = vmax.f32 %v3002, 0.0
        %v3035 = vmax.f32 %v3003, 0.0
        %v3036 = vmax.f32 %v3004, 0.0
        %v3037 = vmax.f32 %v3005, 0.0
        %v3038 = vmax.f32 %v3006, 0.0
        %v3039 = vmax.f32 %v3007, 0.0
        %v3040 = vmax.f32 %v3008, 0.0
        %v3041 = vmax.f32 %v3009, 0.0
        %v3042 = vmax.f32 %v3010, 0.0
        %v3043 = vmax.f32 %v3011, 0.0
        %v3044 = vmax.f32 %v3012, 0.0
        %v3045 = vmax.f32 %v3013, 0.0
        %v3046 = vmax.f32 %v3014, 0.0
        %3047 = vst [vmem:[%s271] sm:$0xff] %v3015
        %3048 = vst [vmem:[%s271 + $0x8] sm:$0xff] %v3016
        %3049 = vst [vmem:[%s271 + $0x10] sm:$0xff] %v3017
        %3050 = vst [vmem:[%s271 + $0x18] sm:$0xff] %v3018
        %3051 = vst [vmem:[%s271 + $0x20] sm:$0xff] %v3019
        %3052 = vst [vmem:[%s271 + $0x28] sm:$0xff] %v3020
        %3053 = vst [vmem:[%s271 + $0x30] sm:$0xff] %v3021
        %3054 = vst [vmem:[%s271 + $0x38] sm:$0xff] %v3022
        %3055 = vst [vmem:[%s271 + $0x40] sm:$0xff] %v3023
        %3056 = vst [vmem:[%s271 + $0x48] sm:$0xff] %v3024
        %3057 = vst [vmem:[%s271 + $0x50] sm:$0xff] %v3025
        %3058 = vst [vmem:[%s271 + $0x58] sm:$0xff] %v3026
        %3059 = vst [vmem:[%s271 + $0x60] sm:$0xff] %v3027
        %3060 = vst [vmem:[%s271 + $0x68] sm:$0xff] %v3028
        %3061 = vst [vmem:[%s271 + $0x70] sm:$0xff] %v3029
        %3062 = vst [vmem:[%s271 + $0x78] sm:$0xff] %v3030
        %3063 = vst [vmem:[%s271 + $0x80] sm:$0xff] %v3031
        %3064 = vst [vmem:[%s271 + $0x88] sm:$0xff] %v3032
        %3065 = vst [vmem:[%s271 + $0x90] sm:$0xff] %v3033
        %3066 = vst [vmem:[%s271 + $0x98] sm:$0xff] %v3034
        %3067 = vst [vmem:[%s271 + $0xa0] sm:$0xff] %v3035
        %3068 = vst [vmem:[%s271 + $0xa8] sm:$0xff] %v3036
        %3069 = vst [vmem:[%s271 + $0xb0] sm:$0xff] %v3037
        %3070 = vst [vmem:[%s271 + $0xb8] sm:$0xff] %v3038
        %3071 = vst [vmem:[%s271 + $0xc0] sm:$0xff] %v3039
        %3072 = vst [vmem:[%s271 + $0xc8] sm:$0xff] %v3040
        %3073 = vst [vmem:[%s271 + $0xd0] sm:$0xff] %v3041
        %3074 = vst [vmem:[%s271 + $0xd8] sm:$0xff] %v3042
        %3075 = vst [vmem:[%s271 + $0xe0] sm:$0xff] %v3043
        %3076 = vst [vmem:[%s271 + $0xe8] sm:$0xff] %v3044
        %3077 = vst [vmem:[%s271 + $0xf0] sm:$0xff] %v3045
        %3078 = vst [vmem:[%s271 + $0xf8] sm:$0xff] %v3046
        %s3079 = sand.u32 %s181, 1
        %s3080 = scalar_lea.sflag [#allocation4], %s3079
        %s3081 = sand.u32 %s181, 1
        %s3082 = smul.addr %s3081, 256
        %s3083 = scalar_lea.vmem [#allocation3], %s3082
        // Predicated region
        $region49: #{tpu_custom_call.1} parent=47 // pred_check
          %p3084 = pneg %p191
        $region50: #{tpu_custom_call.1} parent=47 // pred_check_branch
          %3086 = sbr.rel (%p3084) target = $region52
        $region51: #{tpu_custom_call.1} parent=47 // pred_region
          %s3088 = ssub.s32 4096, 4096
          %3089 = vsyncadd %s3080, %s3088
          %s3090 = smul.addr %s21, 32
          %s3091 = smul.addr %s3090, 128
          %s3092 = scalar_lea.hbm %s7, %s3091
          %s3093 = sshll.u32 %s3083, 4
          %s3094 = int_to_ptr.vmem [resolvable:$true] %s3093
          %3099 = dma.vmem_to_hbm [thread:$0]  %s3094, 4096, %s3092, %s3080, 128, 128, 8
        $region52: #{tpu_custom_call.1} parent=47 // pred_fallthru
          _
      $region48: #{tpu_custom_call.1} parent=5 // pred_fallthru
        _
      %p3100 = scmp.le.s32.totalorder 2, %s16
      // Predicated region
      $region53: #{tpu_custom_call.1} parent=5 // pred_check
        %p3101 = pneg %p3100
      $region54: #{tpu_custom_call.1} parent=5 // pred_check_branch
        %3103 = sbr.rel (%p3101) target = $region56
      $region55: #{tpu_custom_call.1} parent=5 // pred_region
        %s3104 = ssub.s32 %s16, 2
        // Predicated region
        $region57: #{tpu_custom_call.1} parent=55 // pred_check
          %p3105 = pneg %p197
        $region58: #{tpu_custom_call.1} parent=55 // pred_check_branch
          %3107 = sbr.rel (%p3105) target = $region60
        $region59: #{tpu_custom_call.1} parent=55 // pred_region
          %s3108 = sand.u32 %s182, 1
          %s3109 = scalar_lea.sflag [#allocation4], %s3108
          %s3110 = sand.u32 %s182, 1
          %s3111 = smul.addr %s3110, 256
          %s3112 = scalar_lea.vmem [#allocation3], %s3111
          %3113 = dma.done %s3109, 4096
        $region60: #{tpu_custom_call.1} parent=55 // pred_fallthru
          _
      $region56: #{tpu_custom_call.1} parent=5 // pred_fallthru
        _
    $region6: #{tpu_custom_call.1} parent=1 // loop_footer
      %s20 = sadd.s32 1, %s16
    $region7: #{tpu_custom_call.1} parent=1 // loop_footer_branch
      %15 = sbr.rel target = $region3
    $region8: #{tpu_custom_call.1} parent=1 // loop_exit
      _
    %3114 = vsyncpa [#allocation4], 1
    %s3115 = scalar_lea.sflag [#allocation4], 1
    %3116 = vsyncpa %s3115, 1

</llo_original>
